<compile_context>
chip_gen: v7x
topology: tpu7x:2x2x1
jax: 0.10.0
libtpu: 0.0.40
codegen_flags: <defaults>
</compile_context>

<pallas_src>
import functools

import jax
import jax.numpy as jnp
from jax.experimental import pallas as pl
from jax.experimental.pallas import tpu as pltpu

F32 = jnp.float32
LN_EPS = 1e-5
# MXU operand dtype (accumulation stays f32 via preferred_element_type).
MATMUL_DTYPE = jnp.bfloat16
# Key-tile size above which attention switches to online softmax (bounds the
# materialized score block to [T, _KV_TILE] for long decoder sequences).
_KV_TILE = 512


@functools.lru_cache(maxsize=None)
def _vmem_limit_bytes():
    cap = 128 * 1024 * 1024
    try:
        info = pltpu.get_tpu_info()
        cap = int(getattr(info, "vmem_capacity_bytes", cap) or cap)
    except Exception:
        pass
    # ~3/4 of physical, clamped: 48 MiB on 64 MiB parts (v7x), 96 MiB on
    # 128 MiB parts (v5e/v6e).
    return int(min(max(cap * 3 // 4, 32 * 1024 * 1024), 96 * 1024 * 1024))


def _cparams():
    return pltpu.CompilerParams(dimension_semantics=("parallel",),
                                vmem_limit_bytes=_vmem_limit_bytes())


def _pick_bb(batch):
    """Largest per-step batch that still leaves >= 2 grid steps (megacore)."""
    if batch <= 2:
        return 1
    for bb in range(batch // 2, 0, -1):
        if batch % bb == 0:
            return bb
    return 1


# ------------------------- in-kernel math helpers ---------------------------

def _mm(a, b):
    return jnp.dot(a.astype(MATMUL_DTYPE), b.astype(MATMUL_DTYPE),
                   preferred_element_type=jnp.float32)


def _qkt(q, k):
    # q @ k.T without materializing an explicit transpose.
    return jax.lax.dot_general(
        q.astype(MATMUL_DTYPE), k.astype(MATMUL_DTYPE),
        dimension_numbers=(((1,), (1,)), ((), ())),
        preferred_element_type=jnp.float32)


def _layer_norm(y, g, b):
    mu = jnp.mean(y, axis=-1, keepdims=True)
    var = jnp.mean(jnp.square(y - mu), axis=-1, keepdims=True)
    return (y - mu) * jax.lax.rsqrt(var + LN_EPS) * g + b


def _shift_rows(x, shift):
    """Row-shifted copy: out[t] = x[t + shift], zero padded at the edges."""
    t, c = x.shape
    if shift == 0:
        return x
    z = jnp.zeros((abs(shift), c), x.dtype)
    if shift > 0:
        return jnp.concatenate([x[shift:], z], axis=0)
    return jnp.concatenate([z, x[:t + shift]], axis=0)


def _im2col(x_flat, ksz, bb, t):
    """[Bb*T, C] -> [Bb*T, K*C] 'same'-padded conv patches (per-sequence)."""
    if ksz == 1:
        return x_flat
    pad = (ksz - 1) // 2
    rows = []
    for b in range(bb):
        xb = x_flat[b * t:(b + 1) * t]
        rows.append(jnp.concatenate(
            [_shift_rows(xb, k - pad) for k in range(ksz)], axis=-1))
    return jnp.concatenate(rows, axis=0) if bb > 1 else rows[0]


def _softmax_ctx(q, k, v, madd):
    """Masked softmax(q k^T) v for one head of one sequence.

    Full scores for short sequences; key-tiled online softmax for long ones so
    VMEM / vreg pressure stays bounded on v7x (64 MiB VMEM) decoder lengths.
    pl.reciprocal(approx=True) gives ~1e-3 rel. error vs. the f32 reference.
    """
    t = q.shape[0]
    if t <= _KV_TILE:
        s = _qkt(q, k) + madd
        s = s - jnp.max(s, axis=-1, keepdims=True)
        p = jnp.exp(s)
        return _mm(p, v) * pl.reciprocal(jnp.sum(p, axis=-1, keepdims=True),
                                         approx=True)
    m = jnp.full((t, 1), -1e30, jnp.float32)
    l = jnp.zeros((t, 1), jnp.float32)
    acc = jnp.zeros((t, v.shape[1]), jnp.float32)
    for s0 in range(0, t, _KV_TILE):
        s1 = min(s0 + _KV_TILE, t)
        sc = _qkt(q, k[s0:s1]) + madd[:, s0:s1]
        m_new = jnp.maximum(m, jnp.max(sc, axis=-1, keepdims=True))
        a = jnp.exp(m - m_new)
        p = jnp.exp(sc - m_new)
        l = a * l + jnp.sum(p, axis=-1, keepdims=True)
        acc = a * acc + _mm(p, v[s0:s1])
        m = m_new
    return acc * pl.reciprocal(l, approx=True)


# ----------------------------- Pallas kernels ------------------------------

def _fft_block_kernel(x_ref, madd_ref, npad_ref,
                      wqkv_ref, bqkv_ref, wo_ref, bo_ref, g1_ref, be1_ref,
                      w1_ref, b1_ref, w2_ref, b2_ref, g2_ref, be2_ref,
                      o_ref, *, n_head, d_k):
    """Fused FFT block: attention (+res+LN) and conv FFN (+res+LN)."""
    bb, t, d = x_ref.shape
    hd = n_head * d_k
    fh = w1_ref.shape[1]
    k1 = w1_ref.shape[0] // d
    k2 = w2_ref.shape[0] // fh

    x = x_ref[...].astype(jnp.float32).reshape(bb * t, d)
    npad = npad_ref[...].reshape(bb * t, 1)

    # --- self attention (Q scale folded into w_qkv; mask is additive bias) ---
    qkv = _mm(x, wqkv_ref[...]) + bqkv_ref[...]            # [Bb*T, 3*H*dk]
    ctx_rows = []
    for b in range(bb):
        qkv_b = qkv[b * t:(b + 1) * t]
        madd = madd_ref[b]                                  # [1, T]
        heads = []
        for h in range(n_head):
            q = qkv_b[:, h * d_k:(h + 1) * d_k]
            k = qkv_b[:, (n_head + h) * d_k:(n_head + h + 1) * d_k]
            v = qkv_b[:, (2 * n_head + h) * d_k:(2 * n_head + h + 1) * d_k]
            heads.append(_softmax_ctx(q, k, v, madd))
        ctx_rows.append(jnp.concatenate(heads, axis=-1))    # [T, H*dk]
    ctx = jnp.concatenate(ctx_rows, axis=0) if bb > 1 else ctx_rows[0]
    y = _mm(ctx, wo_ref[...]) + bo_ref[...] + x             # single out-proj matmul
    y = _layer_norm(y, g1_ref[...], be1_ref[...]) * npad

    # --- conv FFN: im2col -> one matmul per conv ---
    h1 = jnp.maximum(_mm(_im2col(y, k1, bb, t), w1_ref[...]) + b1_ref[...], 0.0)
    y2 = _mm(_im2col(h1, k2, bb, t), w2_ref[...]) + b2_ref[...] + y
    y2 = _layer_norm(y2, g2_ref[...], be2_ref[...]) * npad
    o_ref[...] = y2.reshape(bb, t, d).astype(o_ref.dtype)


def _predictor_kernel(x_ref, w1_ref, b1_ref, g1_ref, be1_ref,
                      w2_ref, b2_ref, g2_ref, be2_ref,
                      wl_ref, bl_ref, o_ref):
    """Fused variance predictor: conv+ReLU+LN, conv+ReLU+LN, [F->1] linear, ReLU."""
    bb, t, d = x_ref.shape
    ff = w1_ref.shape[1]
    ksz = w1_ref.shape[0] // d

    x = x_ref[...].astype(jnp.float32).reshape(bb * t, d)
    h = jnp.maximum(_mm(_im2col(x, ksz, bb, t), w1_ref[...]) + b1_ref[...], 0.0)
    h = _layer_norm(h, g1_ref[...], be1_ref[...])
    h2 = jnp.maximum(_mm(_im2col(h, ksz, bb, t), w2_ref[...]) + b2_ref[...], 0.0)
    h2 = _layer_norm(h2, g2_ref[...], be2_ref[...])
    # Final [F -> 1] projection as a lane-reduce (avoids an N=1 MXU matmul).
    val = jnp.sum(h2 * wl_ref[...], axis=-1, keepdims=True) + bl_ref[...]
    val = jnp.maximum(val, 0.0)
    # 1-lane output => vst.msk partial stores; accepted (tiny data volume).
    o_ref[...] = val.reshape(bb, t, 1).astype(o_ref.dtype)


def _mel_mask_kernel(x_ref, keep_ref, w_ref, b_ref, o_ref):
    """Fused mel_linear (lane-padded to a multiple of 128) + mask_tensor."""
    bb, m, d = x_ref.shape
    p = w_ref.shape[1]
    x = x_ref[...].astype(jnp.float32).reshape(bb * m, d)
    y = _mm(x, w_ref[...]) + b_ref[...]
    y = y * keep_ref[...].reshape(bb * m, 1)
    o_ref[...] = y.reshape(bb, m, p).astype(o_ref.dtype)


# ----------------------------- kernel wrappers -------------------------------

def fft_block(x, mask_add, npad_col, p, n_head, d_k):
    B, T, D = x.shape
    bb = _pick_bb(B)
    hd = n_head * d_k
    Fh = p['conv1_w'].shape[1]
    K1 = p['conv1_w'].shape[0] // D
    K2 = p['conv2_w'].shape[0] // Fh
    kern = functools.partial(_fft_block_kernel, n_head=n_head, d_k=d_k)
    bmap = lambda i: (i, 0, 0)
    wmap = lambda i: (0, 0)
    return pl.pallas_call(
        kern,
        out_shape=jax.ShapeDtypeStruct((B, T, D), x.dtype),
        grid=(B // bb,),
        in_specs=[
            pl.BlockSpec((bb, T, D), bmap),
            pl.BlockSpec((bb, 1, T), bmap),
            pl.BlockSpec((bb, T, 1), bmap),
            pl.BlockSpec((D, 3 * hd), wmap),
            pl.BlockSpec((1, 3 * hd), wmap),
            pl.BlockSpec((hd, D), wmap),
            pl.BlockSpec((1, D), wmap),
            pl.BlockSpec((1, D), wmap),
            pl.BlockSpec((1, D), wmap),
            pl.BlockSpec((K1 * D, Fh), wmap),
            pl.BlockSpec((1, Fh), wmap),
            pl.BlockSpec((K2 * Fh, D), wmap),
            pl.BlockSpec((1, D), wmap),
            pl.BlockSpec((1, D), wmap),
            pl.BlockSpec((1, D), wmap),
        ],
        out_specs=pl.BlockSpec((bb, T, D), bmap),
        compiler_params=_cparams(),
    )(x, mask_add, npad_col,
      p['w_qkv'], p['b_qkv'], p['fc_w'], p['fc_b'], p['ln1_g'], p['ln1_b'],
      p['conv1_w'], p['conv1_b'], p['conv2_w'], p['conv2_b'],
      p['ln2_g'], p['ln2_b'])


def variance_predictor(x, p):
    B, T, D = x.shape
    bb = _pick_bb(B)
    Ff = p['conv1_w'].shape[1]
    K = p['conv1_w'].shape[0] // D
    bmap = lambda i: (i, 0, 0)
    wmap = lambda i: (0, 0)
    out = pl.pallas_call(
        _predictor_kernel,
        out_shape=jax.ShapeDtypeStruct((B, T, 1), x.dtype),
        grid=(B // bb,),
        in_specs=[
            pl.BlockSpec((bb, T, D), bmap),
            pl.BlockSpec((K * D, Ff), wmap),
            pl.BlockSpec((1, Ff), wmap),
            pl.BlockSpec((1, Ff), wmap),
            pl.BlockSpec((1, Ff), wmap),
            pl.BlockSpec((K * Ff, Ff), wmap),
            pl.BlockSpec((1, Ff), wmap),
            pl.BlockSpec((1, Ff), wmap),
            pl.BlockSpec((1, Ff), wmap),
            pl.BlockSpec((1, Ff), wmap),
            pl.BlockSpec((1, 1), wmap),
        ],
        out_specs=pl.BlockSpec((bb, T, 1), bmap),
        compiler_params=_cparams(),
    )(x, p['conv1_w'], p['conv1_b'], p['ln1_g'], p['ln1_b'],
      p['conv2_w'], p['conv2_b'], p['ln2_g'], p['ln2_b'],
      p['lin_w'], p['lin_b'])
    return out[..., 0]                                      # [B, T]


def mel_linear_mask(x, w_pad, b_pad, keep_mask, num_mels):
    B, M, D = x.shape
    P = w_pad.shape[1]
    bb = _pick_bb(B)
    out = pl.pallas_call(
        _mel_mask_kernel,
        out_shape=jax.ShapeDtypeStruct((B, M, P), x.dtype),
        grid=(B // bb,),
        in_specs=[pl.BlockSpec((bb, M, D), lambda i: (i, 0, 0)),
                  pl.BlockSpec((bb, M, 1), lambda i: (i, 0, 0)),
                  pl.BlockSpec((D, P), lambda i: (0, 0)),
                  pl.BlockSpec((1, P), lambda i: (0, 0))],
        out_specs=pl.BlockSpec((bb, M, P), lambda i: (i, 0, 0)),
        compiler_params=_cparams(),
    )(x, keep_mask, w_pad, b_pad)
    # TODO(synk): consumers could accept the 128-lane-padded slab directly and
    # skip this extra HBM slice copy.
    return out[..., :num_mels]


# ----------------------------- model components -----------------------------

def sinusoid_table(n_position, d_hid):
    pos = jnp.arange(n_position, dtype=F32)[:, None]
    i = jnp.arange(d_hid, dtype=F32)[None, :]
    angle = pos / jnp.power(10000.0, 2.0 * jnp.floor(i / 2.0) / d_hid)
    table = jnp.where((jnp.arange(d_hid)[None, :] % 2) == 0,
                      jnp.sin(angle), jnp.cos(angle))
    return table.at[0].set(0.0).astype(F32)   # padding position (index 0) zeroed


def _pad_masks(pos):
    pad = (pos == 0)
    # Additive key-padding bias (folded into scores with one add in-kernel).
    mask_add = jnp.where(pad, -1e9, 0.0).astype(F32)[:, None, :]   # [B, 1, T]
    npad_col = (~pad).astype(F32)[:, :, None]                      # [B, T, 1]
    return mask_add, npad_col


def encoder(src_seq, src_pos, params, cfg):
    d = cfg['encoder_dim']
    nh = cfg['encoder_head']
    dk = d // nh
    mask_add, npad_col = _pad_masks(src_pos)
    x = params['word_emb'][src_seq] + params['pos_table'][src_pos]
    for p in params['enc_layers']:
        x = fft_block(x, mask_add, npad_col, p, nh, dk)
    return x, npad_col


def decoder(x, mel_pos, params, cfg):
    d = cfg['decoder_dim']
    nh = cfg['decoder_head']
    dk = d // nh
    mask_add, npad_col = _pad_masks(mel_pos)
    x = x + params['pos_table'][mel_pos]
    for p in params['dec_layers']:
        x = fft_block(x, mask_add, npad_col, p, nh, dk)
    return x


def length_regulate(x, durations, mel_max_length):
    # Glue gather (data-dependent indexing) kept in plain JAX.
    B, T, D = x.shape
    cum = jnp.cumsum(durations, axis=1)                                # [B, T]
    frames = jnp.arange(mel_max_length)                                # [M]
    idx = jnp.sum(frames[None, :, None] >= cum[:, None, :], axis=-1)   # [B, M]
    idx = jnp.clip(idx, 0, T - 1)
    expanded = jnp.take_along_axis(x, idx[:, :, None], axis=1)         # [B, M, D]
    valid = (frames[None, :] < cum[:, -1:]).astype(x.dtype)[..., None]
    return expanded * valid


def variance_adaptor(x, params, cfg, mel_max_length, pitch_target, energy_target,
                     alpha=1.0):
    dur_pred = variance_predictor(x, params['dur_pred'])               # [B, T]
    # TODO(synk): exact LengthRegulator source unavailable; expand by rounded
    # predicted durations (duration targets are not passed to the adaptor).
    dur_round = jnp.clip(jnp.round(dur_pred * alpha), 0, None).astype(jnp.int32)
    expanded = length_regulate(x, dur_round, mel_max_length)           # [B, M, D]
    pitch_pred = variance_predictor(expanded, params['pitch_pred'])    # [B, M]
    energy_pred = variance_predictor(expanded, params['energy_pred'])  # [B, M]
    pitch_src = pitch_target if pitch_target is not None else pitch_pred
    energy_src = energy_target if energy_target is not None else energy_pred
    pitch_emb = params['pitch_emb'][jnp.digitize(pitch_src, params['pitch_bins'])]
    energy_emb = params['energy_emb'][jnp.digitize(energy_src, params['energy_bins'])]
    out = expanded + pitch_emb + energy_emb
    return out, dur_pred, pitch_pred, energy_pred


def fastspeech_forward(params, cfg, src_seq, src_pos, mel_pos=None,
                       mel_max_length=None, duration=None, pitch_target=None,
                       energy_target=None, alpha=1.0):
    enc_output, _non_pad_mask = encoder(src_seq, src_pos, params, cfg)
    if mel_max_length is None:
        mel_max_length = 2 * src_seq.shape[1]
    enc_output, dur_pred, pitch_pred, energy_pred = variance_adaptor(
        enc_output, params, cfg, mel_max_length, pitch_target, energy_target, alpha)
    if mel_pos is None:
        # Mirrors the reference's `mel_pos = duration_predicted` quirk.
        mel_pos = dur_pred.astype(jnp.int32)
    output = decoder(enc_output, mel_pos, params, cfg)
    # mask_tensor semantics: zero out frames >= max(mel_pos) per batch element.
    lengths = jnp.max(mel_pos, axis=-1)
    keep = (jnp.arange(output.shape[1])[None, :] < lengths[:, None])
    keep = keep.astype(F32)[..., None]
    output = mel_linear_mask(output, params['mel_w_pad'], params['mel_b_pad'],
                             keep, cfg['num_mels'])
    return output, dur_pred, pitch_pred, energy_pred


# --------------------------- parameter initialization -----------------------

def _rnd(key, shape, scale=0.05):
    return scale * jax.random.normal(key, shape, dtype=F32)


def init_fft_block(key, d_model, n_head, d_k, d_v, d_inner, kernels):
    ks = jax.random.split(key, 6)
    attn_scale = 1.0 / float(d_k) ** 0.5
    # Attention 1/sqrt(dk) scale folded into the Q projection (weights + bias).
    w_q = _rnd(ks[0], (d_model, n_head * d_k)) * attn_scale
    w_k = _rnd(ks[1], (d_model, n_head * d_k))
    w_v = _rnd(ks[2], (d_model, n_head * d_v))
    k1, k2 = kernels
    conv1 = _rnd(ks[4], (k1, d_model, d_inner))
    conv2 = _rnd(ks[5], (k2, d_inner, d_model))
    return {
        # Q/K/V fused into one [D, 3*H*dk] bf16 weight for a single MXU matmul.
        'w_qkv': jnp.concatenate([w_q, w_k, w_v], axis=1).astype(MATMUL_DTYPE),
        'b_qkv': jnp.zeros((1, n_head * (2 * d_k + d_v)), F32),
        'fc_w': _rnd(ks[3], (n_head * d_v, d_model)).astype(MATMUL_DTYPE),
        'fc_b': jnp.zeros((1, d_model), F32),
        'ln1_g': jnp.ones((1, d_model), F32),
        'ln1_b': jnp.zeros((1, d_model), F32),
        # Conv weights pre-flattened to im2col layout [K*Cin, Cout].
        'conv1_w': conv1.reshape(k1 * d_model, d_inner).astype(MATMUL_DTYPE),
        'conv1_b': jnp.zeros((1, d_inner), F32),
        'conv2_w': conv2.reshape(k2 * d_inner, d_model).astype(MATMUL_DTYPE),
        'conv2_b': jnp.zeros((1, d_model), F32),
        'ln2_g': jnp.ones((1, d_model), F32),
        'ln2_b': jnp.zeros((1, d_model), F32),
    }


def init_predictor(key, d_in, d_filter, kernel):
    ks = jax.random.split(key, 3)
    c1 = _rnd(ks[0], (kernel, d_in, d_filter))
    c2 = _rnd(ks[1], (kernel, d_filter, d_filter))
    return {
        'conv1_w': c1.reshape(kernel * d_in, d_filter).astype(MATMUL_DTYPE),
        'conv1_b': jnp.zeros((1, d_filter), F32),
        'ln1_g': jnp.ones((1, d_filter), F32),
        'ln1_b': jnp.zeros((1, d_filter), F32),
        'conv2_w': c2.reshape(kernel * d_filter, d_filter).astype(MATMUL_DTYPE),
        'conv2_b': jnp.zeros((1, d_filter), F32),
        'ln2_g': jnp.ones((1, d_filter), F32),
        'ln2_b': jnp.zeros((1, d_filter), F32),
        'lin_w': _rnd(ks[2], (1, d_filter)),   # [F->1] lane-reduce row (f32)
        'lin_b': jnp.zeros((1, 1), F32),
    }


def init_params(cfg, key):
    d = cfg['encoder_dim']
    nh = cfg['encoder_head']
    dk = d // nh
    keys = jax.random.split(key, 12)
    we = _rnd(keys[0], (cfg['vocab_size'], d))
    num_mels = cfg['num_mels']
    mel_pad = ((num_mels + 127) // 128) * 128     # lane-dense output slab
    mel_w = _rnd(keys[8], (cfg['decoder_dim'], num_mels))
    params = {
        'word_emb': we.at[0].set(0.0),                       # padding_idx = 0
        'pos_table': sinusoid_table(cfg['max_seq_len'] + 1, d),
        'enc_layers': [init_fft_block(k, d, nh, dk, dk,
                                      cfg['encoder_conv1d_filter_size'],
                                      cfg['fft_conv1d_kernel'])
                       for k in jax.random.split(keys[1], cfg['encoder_n_layer'])],
        'dec_layers': [init_fft_block(k, d, nh, dk, dk,
                                      cfg['decoder_conv1d_filter_size'],
                                      cfg['fft_conv1d_kernel'])
                       for k in jax.random.split(keys[2], cfg['decoder_n_layer'])],
        'dur_pred': init_predictor(keys[3], d,
                                   cfg['duration_predictor_filter_size'],
                                   cfg['duration_predictor_kernel_size']),
        'pitch_pred': init_predictor(keys[4], d,
                                     cfg['duration_predictor_filter_size'],
                                     cfg['duration_predictor_kernel_size']),
        'energy_pred': init_predictor(keys[5], d,
                                      cfg['duration_predictor_filter_size'],
                                      cfg['duration_predictor_kernel_size']),
        'pitch_emb': _rnd(keys[6], (cfg['n_bins'], d)),
        'energy_emb': _rnd(keys[7], (cfg['n_bins'], d)),
        'pitch_bins': jnp.linspace(cfg['pitch_min'], cfg['pitch_max'],
                                   cfg['n_bins'] - 1).astype(F32),
        'energy_bins': jnp.linspace(cfg['energy_min'], cfg['energy_max'],
                                    cfg['n_bins'] - 1).astype(F32),
        'mel_w_pad': jnp.pad(mel_w, ((0, 0), (0, mel_pad - num_mels))
                             ).astype(MATMUL_DTYPE),
        'mel_b_pad': jnp.zeros((1, mel_pad), F32),
    }
    return params


# ----------------------------------- main -----------------------------------

if __name__ == "__main__":
    cfg = dict(
        vocab_size=50, max_seq_len=64,
        encoder_dim=32, encoder_n_layer=2, encoder_head=2,
        encoder_conv1d_filter_size=64,
        decoder_dim=32, decoder_n_layer=2, decoder_head=2,
        decoder_conv1d_filter_size=64,
        fft_conv1d_kernel=(3, 3),
        duration_predictor_filter_size=64,
        duration_predictor_kernel_size=3,
        num_mels=8, n_bins=8,
        pitch_min=0.0, pitch_max=5.0,
        energy_min=0.0, energy_max=5.0,
    )

    key = jax.random.PRNGKey(0)
    pkey, dkey = jax.random.split(key)
    params = init_params(cfg, pkey)

    B, T, M = 2, 8, 16
    src_lens = jnp.array([8, 6], jnp.int32)
    src_pos = jnp.where(jnp.arange(T)[None, :] < src_lens[:, None],
                        jnp.arange(1, T + 1)[None, :], 0).astype(jnp.int32)
    k0, k1, k2, k3 = jax.random.split(dkey, 4)
    tok = jax.random.randint(k0, (B, T), 1, cfg['vocab_size'], jnp.int32)
    src_seq = jnp.where(src_pos > 0, tok, 0)

    mel_lens = jnp.array([16, 12], jnp.int32)
    mel_pos = jnp.where(jnp.arange(M)[None, :] < mel_lens[:, None],
                        jnp.arange(1, M + 1)[None, :], 0).astype(jnp.int32)

    duration = jax.random.randint(k1, (B, T), 1, 4, jnp.int32)   # only printed in ref
    pitch_target = jax.random.uniform(k2, (B, M), F32, 0.0, 5.0)
    energy_target = jax.random.uniform(k3, (B, M), F32, 0.0, 5.0)

    out, dur_p, pitch_p, energy_p = fastspeech_forward(
        params, cfg, src_seq, src_pos, mel_pos=mel_pos, mel_max_length=M,
        duration=duration, pitch_target=pitch_target,
        energy_target=energy_target, alpha=1.0)
    jax.block_until_ready((out, dur_p, pitch_p, energy_p))

    assert out.shape == (B, M, cfg['num_mels'])
    assert dur_p.shape == (B, T)
    assert pitch_p.shape == (B, M)
    assert energy_p.shape == (B, M)
    assert bool(jnp.all(jnp.isfinite(out)))
    print("KERNEL_OK")
</pallas_src>

<mosaic_0001>
module attributes {stable_mosaic.version = 11 : i64} {
  func.func @_fft_block_kernel(%arg0: i32, %arg1: memref<1x8x32xf32, #tpu.memory_space<vmem>>, %arg2: memref<1x1x8xf32, #tpu.memory_space<vmem>>, %arg3: memref<1x8x1xf32, #tpu.memory_space<vmem>>, %arg4: memref<32x96xbf16, #tpu.memory_space<vmem>>, %arg5: memref<1x96xf32, #tpu.memory_space<vmem>>, %arg6: memref<32x32xbf16, #tpu.memory_space<vmem>>, %arg7: memref<1x32xf32, #tpu.memory_space<vmem>>, %arg8: memref<1x32xf32, #tpu.memory_space<vmem>>, %arg9: memref<1x32xf32, #tpu.memory_space<vmem>>, %arg10: memref<96x64xbf16, #tpu.memory_space<vmem>>, %arg11: memref<1x64xf32, #tpu.memory_space<vmem>>, %arg12: memref<192x32xbf16, #tpu.memory_space<vmem>>, %arg13: memref<1x32xf32, #tpu.memory_space<vmem>>, %arg14: memref<1x32xf32, #tpu.memory_space<vmem>>, %arg15: memref<1x32xf32, #tpu.memory_space<vmem>>, %arg16: memref<1x8x32xf32, #tpu.memory_space<vmem>>) attributes {dimension_semantics = [#tpu.dimension_semantics<parallel>], iteration_bounds = array<i64: 2>, scalar_prefetch = 0 : i64, scratch_operands = 0 : i64, tpu.core_type = #tpu.core_type<tc>, window_params = [{transform_indices = @transform_0, window_bounds = array<i64: 1, 8, 32>}, {transform_indices = @transform_1, window_bounds = array<i64: 1, 1, 8>}, {transform_indices = @transform_2, window_bounds = array<i64: 1, 8, 1>}, {pipeline_mode = #tpu.pipeline_mode<synchronous>, transform_indices = @transform_3, window_bounds = array<i64: 32, 96>}, {pipeline_mode = #tpu.pipeline_mode<synchronous>, transform_indices = @transform_4, window_bounds = array<i64: 1, 96>}, {pipeline_mode = #tpu.pipeline_mode<synchronous>, transform_indices = @transform_5, window_bounds = array<i64: 32, 32>}, {pipeline_mode = #tpu.pipeline_mode<synchronous>, transform_indices = @transform_6, window_bounds = array<i64: 1, 32>}, {pipeline_mode = #tpu.pipeline_mode<synchronous>, transform_indices = @transform_7, window_bounds = array<i64: 1, 32>}, {pipeline_mode = #tpu.pipeline_mode<synchronous>, transform_indices = @transform_8, window_bounds = array<i64: 1, 32>}, {pipeline_mode = #tpu.pipeline_mode<synchronous>, transform_indices = @transform_9, window_bounds = array<i64: 96, 64>}, {pipeline_mode = #tpu.pipeline_mode<synchronous>, transform_indices = @transform_10, window_bounds = array<i64: 1, 64>}, {pipeline_mode = #tpu.pipeline_mode<synchronous>, transform_indices = @transform_11, window_bounds = array<i64: 192, 32>}, {pipeline_mode = #tpu.pipeline_mode<synchronous>, transform_indices = @transform_12, window_bounds = array<i64: 1, 32>}, {pipeline_mode = #tpu.pipeline_mode<synchronous>, transform_indices = @transform_13, window_bounds = array<i64: 1, 32>}, {pipeline_mode = #tpu.pipeline_mode<synchronous>, transform_indices = @transform_14, window_bounds = array<i64: 1, 32>}, {transform_indices = @transform_15, window_bounds = array<i64: 1, 8, 32>}]} {
    %c0 = arith.constant 0 : index
    %c0_0 = arith.constant 0 : index
    %c0_1 = arith.constant 0 : index
    %0 = vector.load %arg1[%c0, %c0_0, %c0_1] : memref<1x8x32xf32, #tpu.memory_space<vmem>>, vector<1x8x32xf32>
    %1 = vector.shape_cast %0 : vector<1x8x32xf32> to vector<8x32xf32>
    %c0_2 = arith.constant 0 : index
    %c0_3 = arith.constant 0 : index
    %c0_4 = arith.constant 0 : index
    %2 = vector.load %arg3[%c0_2, %c0_3, %c0_4] : memref<1x8x1xf32, #tpu.memory_space<vmem>>, vector<1x8x1xf32>
    %3 = vector.shape_cast %2 : vector<1x8x1xf32> to vector<8x1xf32>
    %c0_5 = arith.constant 0 : index
    %c0_6 = arith.constant 0 : index
    %4 = vector.load %arg4[%c0_5, %c0_6] : memref<32x96xbf16, #tpu.memory_space<vmem>>, vector<32x96xbf16>
    %5 = arith.truncf %1 : vector<8x32xf32> to vector<8x32xbf16>
    %cst = arith.constant dense<0.000000e+00> : vector<8x96xf32>
    %6 = tpu.matmul %5, %4, %cst {dimension_numbers = #tpu.dot_dimension_numbers<[1], [0], [0], [1], [0, 0, 1, 1], [], []>} : vector<8x32xbf16>, vector<32x96xbf16>, vector<8x96xf32> -> vector<8x96xf32>
    %c0_7 = arith.constant 0 : index
    %c0_8 = arith.constant 0 : index
    %7 = vector.load %arg5[%c0_7, %c0_8] : memref<1x96xf32, #tpu.memory_space<vmem>>, vector<1x96xf32>
    %8 = vector.broadcast %7 : vector<1x96xf32> to vector<8x96xf32>
    %9 = arith.addf %6, %8 : vector<8x96xf32>
    %c0_9 = arith.constant 0 : index
    %c0_10 = arith.constant 0 : index
    %c0_11 = arith.constant 0 : index
    %10 = vector.load %arg2[%c0_9, %c0_10, %c0_11] : memref<1x1x8xf32, #tpu.memory_space<vmem>>, vector<1x1x8xf32>
    %11 = vector.shape_cast %10 : vector<1x1x8xf32> to vector<1x8xf32>
    %12 = vector.extract_strided_slice %9 {offsets = [0, 0], sizes = [8, 16], strides = [1, 1]} : vector<8x96xf32> to vector<8x16xf32>
    %13 = vector.extract_strided_slice %9 {offsets = [0, 32], sizes = [8, 16], strides = [1, 1]} : vector<8x96xf32> to vector<8x16xf32>
    %14 = vector.extract_strided_slice %9 {offsets = [0, 64], sizes = [8, 16], strides = [1, 1]} : vector<8x96xf32> to vector<8x16xf32>
    %15 = arith.truncf %12 : vector<8x16xf32> to vector<8x16xbf16>
    %16 = arith.truncf %13 : vector<8x16xf32> to vector<8x16xbf16>
    %cst_12 = arith.constant dense<0.000000e+00> : vector<8x8xf32>
    %17 = tpu.matmul %15, %16, %cst_12 {dimension_numbers = #tpu.dot_dimension_numbers<[1], [1], [0], [0], [0, 0, 1, 0], [], []>} : vector<8x16xbf16>, vector<8x16xbf16>, vector<8x8xf32> -> vector<8x8xf32>
    %18 = vector.broadcast %11 : vector<1x8xf32> to vector<8x8xf32>
    %19 = arith.addf %17, %18 : vector<8x8xf32>
    %cst_13 = arith.constant dense<0xFF800000> : vector<8xf32>
    %20 = vector.multi_reduction <maximumf>, %19, %cst_13 [1] : vector<8x8xf32> to vector<8xf32>
    %21 = vector.shape_cast %20 : vector<8xf32> to vector<8x1xf32>
    %22 = vector.broadcast %21 : vector<8x1xf32> to vector<8x8xf32>
    %23 = arith.subf %19, %22 : vector<8x8xf32>
    %24 = math.exp %23 : vector<8x8xf32>
    %25 = arith.truncf %24 : vector<8x8xf32> to vector<8x8xbf16>
    %26 = arith.truncf %14 : vector<8x16xf32> to vector<8x16xbf16>
    %cst_14 = arith.constant dense<0.000000e+00> : vector<8x16xf32>
    %27 = tpu.matmul %25, %26, %cst_14 {dimension_numbers = #tpu.dot_dimension_numbers<[1], [0], [0], [1], [0, 0, 1, 1], [], []>} : vector<8x8xbf16>, vector<8x16xbf16>, vector<8x16xf32> -> vector<8x16xf32>
    %cst_15 = arith.constant dense<0.000000e+00> : vector<8xf32>
    %28 = vector.multi_reduction <add>, %24, %cst_15 [1] : vector<8x8xf32> to vector<8xf32>
    %29 = vector.shape_cast %28 : vector<8xf32> to vector<8x1xf32>
    %30 = tpu.reciprocal %29 {approx = true} : vector<8x1xf32> -> vector<8x1xf32>
    %31 = vector.broadcast %30 : vector<8x1xf32> to vector<8x16xf32>
    %32 = arith.mulf %27, %31 : vector<8x16xf32>
    %33 = vector.extract_strided_slice %9 {offsets = [0, 16], sizes = [8, 16], strides = [1, 1]} : vector<8x96xf32> to vector<8x16xf32>
    %34 = vector.extract_strided_slice %9 {offsets = [0, 48], sizes = [8, 16], strides = [1, 1]} : vector<8x96xf32> to vector<8x16xf32>
    %35 = vector.extract_strided_slice %9 {offsets = [0, 80], sizes = [8, 16], strides = [1, 1]} : vector<8x96xf32> to vector<8x16xf32>
    %36 = arith.truncf %33 : vector<8x16xf32> to vector<8x16xbf16>
    %37 = arith.truncf %34 : vector<8x16xf32> to vector<8x16xbf16>
    %cst_16 = arith.constant dense<0.000000e+00> : vector<8x8xf32>
    %38 = tpu.matmul %36, %37, %cst_16 {dimension_numbers = #tpu.dot_dimension_numbers<[1], [1], [0], [0], [0, 0, 1, 0], [], []>} : vector<8x16xbf16>, vector<8x16xbf16>, vector<8x8xf32> -> vector<8x8xf32>
    %39 = vector.broadcast %11 : vector<1x8xf32> to vector<8x8xf32>
    %40 = arith.addf %38, %39 : vector<8x8xf32>
    %cst_17 = arith.constant dense<0xFF800000> : vector<8xf32>
    %41 = vector.multi_reduction <maximumf>, %40, %cst_17 [1] : vector<8x8xf32> to vector<8xf32>
    %42 = vector.shape_cast %41 : vector<8xf32> to vector<8x1xf32>
    %43 = vector.broadcast %42 : vector<8x1xf32> to vector<8x8xf32>
    %44 = arith.subf %40, %43 : vector<8x8xf32>
    %45 = math.exp %44 : vector<8x8xf32>
    %46 = arith.truncf %45 : vector<8x8xf32> to vector<8x8xbf16>
    %47 = arith.truncf %35 : vector<8x16xf32> to vector<8x16xbf16>
    %cst_18 = arith.constant dense<0.000000e+00> : vector<8x16xf32>
    %48 = tpu.matmul %46, %47, %cst_18 {dimension_numbers = #tpu.dot_dimension_numbers<[1], [0], [0], [1], [0, 0, 1, 1], [], []>} : vector<8x8xbf16>, vector<8x16xbf16>, vector<8x16xf32> -> vector<8x16xf32>
    %cst_19 = arith.constant dense<0.000000e+00> : vector<8xf32>
    %49 = vector.multi_reduction <add>, %45, %cst_19 [1] : vector<8x8xf32> to vector<8xf32>
    %50 = vector.shape_cast %49 : vector<8xf32> to vector<8x1xf32>
    %51 = tpu.reciprocal %50 {approx = true} : vector<8x1xf32> -> vector<8x1xf32>
    %52 = vector.broadcast %51 : vector<8x1xf32> to vector<8x16xf32>
    %53 = arith.mulf %48, %52 : vector<8x16xf32>
    %54 = tpu.concatenate %32, %53 in 1 : vector<8x16xf32>, vector<8x16xf32> -> vector<8x32xf32>
    %c0_20 = arith.constant 0 : index
    %c0_21 = arith.constant 0 : index
    %55 = vector.load %arg6[%c0_20, %c0_21] : memref<32x32xbf16, #tpu.memory_space<vmem>>, vector<32x32xbf16>
    %56 = arith.truncf %54 : vector<8x32xf32> to vector<8x32xbf16>
    %cst_22 = arith.constant dense<0.000000e+00> : vector<8x32xf32>
    %57 = tpu.matmul %56, %55, %cst_22 {dimension_numbers = #tpu.dot_dimension_numbers<[1], [0], [0], [1], [0, 0, 1, 1], [], []>} : vector<8x32xbf16>, vector<32x32xbf16>, vector<8x32xf32> -> vector<8x32xf32>
    %c0_23 = arith.constant 0 : index
    %c0_24 = arith.constant 0 : index
    %58 = vector.load %arg7[%c0_23, %c0_24] : memref<1x32xf32, #tpu.memory_space<vmem>>, vector<1x32xf32>
    %59 = vector.broadcast %58 : vector<1x32xf32> to vector<8x32xf32>
    %60 = arith.addf %57, %59 : vector<8x32xf32>
    %61 = arith.addf %60, %1 : vector<8x32xf32>
    %c0_25 = arith.constant 0 : index
    %c0_26 = arith.constant 0 : index
    %62 = vector.load %arg8[%c0_25, %c0_26] : memref<1x32xf32, #tpu.memory_space<vmem>>, vector<1x32xf32>
    %c0_27 = arith.constant 0 : index
    %c0_28 = arith.constant 0 : index
    %63 = vector.load %arg9[%c0_27, %c0_28] : memref<1x32xf32, #tpu.memory_space<vmem>>, vector<1x32xf32>
    %cst_29 = arith.constant dense<0.000000e+00> : vector<8xf32>
    %64 = vector.multi_reduction <add>, %61, %cst_29 [1] : vector<8x32xf32> to vector<8xf32>
    %65 = vector.shape_cast %64 : vector<8xf32> to vector<8x1xf32>
    %cst_30 = arith.constant 3.200000e+01 : f32
    %66 = vector.broadcast %cst_30 : f32 to vector<8x1xf32>
    %67 = arith.divf %65, %66 : vector<8x1xf32>
    %68 = vector.broadcast %67 : vector<8x1xf32> to vector<8x32xf32>
    %69 = arith.subf %61, %68 : vector<8x32xf32>
    %70 = arith.mulf %69, %69 : vector<8x32xf32>
    %cst_31 = arith.constant dense<0.000000e+00> : vector<8xf32>
    %71 = vector.multi_reduction <add>, %70, %cst_31 [1] : vector<8x32xf32> to vector<8xf32>
    %72 = vector.shape_cast %71 : vector<8xf32> to vector<8x1xf32>
    %cst_32 = arith.constant 3.200000e+01 : f32
    %73 = vector.broadcast %cst_32 : f32 to vector<8x1xf32>
    %74 = arith.divf %72, %73 : vector<8x1xf32>
    %75 = vector.broadcast %67 : vector<8x1xf32> to vector<8x32xf32>
    %76 = arith.subf %61, %75 : vector<8x32xf32>
    %cst_33 = arith.constant 9.99999974E-6 : f32
    %77 = vector.broadcast %cst_33 : f32 to vector<8x1xf32>
    %78 = arith.addf %74, %77 : vector<8x1xf32>
    %79 = math.rsqrt %78 : vector<8x1xf32>
    %80 = vector.broadcast %79 : vector<8x1xf32> to vector<8x32xf32>
    %81 = arith.mulf %76, %80 : vector<8x32xf32>
    %82 = vector.broadcast %62 : vector<1x32xf32> to vector<8x32xf32>
    %83 = arith.mulf %81, %82 : vector<8x32xf32>
    %84 = vector.broadcast %63 : vector<1x32xf32> to vector<8x32xf32>
    %85 = arith.addf %83, %84 : vector<8x32xf32>
    %86 = vector.broadcast %3 : vector<8x1xf32> to vector<8x32xf32>
    %87 = arith.mulf %85, %86 : vector<8x32xf32>
    %cst_34 = arith.constant 0.000000e+00 : f32
    %88 = vector.broadcast %cst_34 : f32 to vector<1x32xf32>
    %89 = vector.extract_strided_slice %87 {offsets = [0, 0], sizes = [7, 32], strides = [1, 1]} : vector<8x32xf32> to vector<7x32xf32>
    %90 = tpu.concatenate %88, %89 in 0 : vector<1x32xf32>, vector<7x32xf32> -> vector<8x32xf32>
    %cst_35 = arith.constant 0.000000e+00 : f32
    %91 = vector.broadcast %cst_35 : f32 to vector<1x32xf32>
    %92 = vector.extract_strided_slice %87 {offsets = [1, 0], sizes = [7, 32], strides = [1, 1]} : vector<8x32xf32> to vector<7x32xf32>
    %93 = tpu.concatenate %92, %91 in 0 : vector<7x32xf32>, vector<1x32xf32> -> vector<8x32xf32>
    %94 = tpu.concatenate %90, %87, %93 in 1 : vector<8x32xf32>, vector<8x32xf32>, vector<8x32xf32> -> vector<8x96xf32>
    %c0_36 = arith.constant 0 : index
    %c0_37 = arith.constant 0 : index
    %95 = vector.load %arg10[%c0_36, %c0_37] : memref<96x64xbf16, #tpu.memory_space<vmem>>, vector<96x64xbf16>
    %96 = arith.truncf %94 : vector<8x96xf32> to vector<8x96xbf16>
    %cst_38 = arith.constant dense<0.000000e+00> : vector<8x64xf32>
    %97 = tpu.matmul %96, %95, %cst_38 {dimension_numbers = #tpu.dot_dimension_numbers<[1], [0], [0], [1], [0, 0, 1, 1], [], []>} : vector<8x96xbf16>, vector<96x64xbf16>, vector<8x64xf32> -> vector<8x64xf32>
    %c0_39 = arith.constant 0 : index
    %c0_40 = arith.constant 0 : index
    %98 = vector.load %arg11[%c0_39, %c0_40] : memref<1x64xf32, #tpu.memory_space<vmem>>, vector<1x64xf32>
    %99 = vector.broadcast %98 : vector<1x64xf32> to vector<8x64xf32>
    %100 = arith.addf %97, %99 : vector<8x64xf32>
    %cst_41 = arith.constant 0.000000e+00 : f32
    %101 = vector.broadcast %cst_41 : f32 to vector<8x64xf32>
    %102 = arith.maximumf %100, %101 : vector<8x64xf32>
    %cst_42 = arith.constant 0.000000e+00 : f32
    %103 = vector.broadcast %cst_42 : f32 to vector<1x64xf32>
    %104 = vector.extract_strided_slice %102 {offsets = [0, 0], sizes = [7, 64], strides = [1, 1]} : vector<8x64xf32> to vector<7x64xf32>
    %105 = tpu.concatenate %103, %104 in 0 : vector<1x64xf32>, vector<7x64xf32> -> vector<8x64xf32>
    %cst_43 = arith.constant 0.000000e+00 : f32
    %106 = vector.broadcast %cst_43 : f32 to vector<1x64xf32>
    %107 = vector.extract_strided_slice %102 {offsets = [1, 0], sizes = [7, 64], strides = [1, 1]} : vector<8x64xf32> to vector<7x64xf32>
    %108 = tpu.concatenate %107, %106 in 0 : vector<7x64xf32>, vector<1x64xf32> -> vector<8x64xf32>
    %109 = tpu.concatenate %105, %102, %108 in 1 : vector<8x64xf32>, vector<8x64xf32>, vector<8x64xf32> -> vector<8x192xf32>
    %c0_44 = arith.constant 0 : index
    %c0_45 = arith.constant 0 : index
    %110 = vector.load %arg12[%c0_44, %c0_45] : memref<192x32xbf16, #tpu.memory_space<vmem>>, vector<192x32xbf16>
    %111 = arith.truncf %109 : vector<8x192xf32> to vector<8x192xbf16>
    %cst_46 = arith.constant dense<0.000000e+00> : vector<8x32xf32>
    %112 = tpu.matmul %111, %110, %cst_46 {dimension_numbers = #tpu.dot_dimension_numbers<[1], [0], [0], [1], [0, 0, 1, 1], [], []>} : vector<8x192xbf16>, vector<192x32xbf16>, vector<8x32xf32> -> vector<8x32xf32>
    %c0_47 = arith.constant 0 : index
    %c0_48 = arith.constant 0 : index
    %113 = vector.load %arg13[%c0_47, %c0_48] : memref<1x32xf32, #tpu.memory_space<vmem>>, vector<1x32xf32>
    %114 = vector.broadcast %113 : vector<1x32xf32> to vector<8x32xf32>
    %115 = arith.addf %112, %114 : vector<8x32xf32>
    %116 = arith.addf %115, %87 : vector<8x32xf32>
    %c0_49 = arith.constant 0 : index
    %c0_50 = arith.constant 0 : index
    %117 = vector.load %arg14[%c0_49, %c0_50] : memref<1x32xf32, #tpu.memory_space<vmem>>, vector<1x32xf32>
    %c0_51 = arith.constant 0 : index
    %c0_52 = arith.constant 0 : index
    %118 = vector.load %arg15[%c0_51, %c0_52] : memref<1x32xf32, #tpu.memory_space<vmem>>, vector<1x32xf32>
    %cst_53 = arith.constant dense<0.000000e+00> : vector<8xf32>
    %119 = vector.multi_reduction <add>, %116, %cst_53 [1] : vector<8x32xf32> to vector<8xf32>
    %120 = vector.shape_cast %119 : vector<8xf32> to vector<8x1xf32>
    %cst_54 = arith.constant 3.200000e+01 : f32
    %121 = vector.broadcast %cst_54 : f32 to vector<8x1xf32>
    %122 = arith.divf %120, %121 : vector<8x1xf32>
    %123 = vector.broadcast %122 : vector<8x1xf32> to vector<8x32xf32>
    %124 = arith.subf %116, %123 : vector<8x32xf32>
    %125 = arith.mulf %124, %124 : vector<8x32xf32>
    %cst_55 = arith.constant dense<0.000000e+00> : vector<8xf32>
    %126 = vector.multi_reduction <add>, %125, %cst_55 [1] : vector<8x32xf32> to vector<8xf32>
    %127 = vector.shape_cast %126 : vector<8xf32> to vector<8x1xf32>
    %cst_56 = arith.constant 3.200000e+01 : f32
    %128 = vector.broadcast %cst_56 : f32 to vector<8x1xf32>
    %129 = arith.divf %127, %128 : vector<8x1xf32>
    %130 = vector.broadcast %122 : vector<8x1xf32> to vector<8x32xf32>
    %131 = arith.subf %116, %130 : vector<8x32xf32>
    %cst_57 = arith.constant 9.99999974E-6 : f32
    %132 = vector.broadcast %cst_57 : f32 to vector<8x1xf32>
    %133 = arith.addf %129, %132 : vector<8x1xf32>
    %134 = math.rsqrt %133 : vector<8x1xf32>
    %135 = vector.broadcast %134 : vector<8x1xf32> to vector<8x32xf32>
    %136 = arith.mulf %131, %135 : vector<8x32xf32>
    %137 = vector.broadcast %117 : vector<1x32xf32> to vector<8x32xf32>
    %138 = arith.mulf %136, %137 : vector<8x32xf32>
    %139 = vector.broadcast %118 : vector<1x32xf32> to vector<8x32xf32>
    %140 = arith.addf %138, %139 : vector<8x32xf32>
    %141 = vector.broadcast %3 : vector<8x1xf32> to vector<8x32xf32>
    %142 = arith.mulf %140, %141 : vector<8x32xf32>
    %143 = vector.shape_cast %142 : vector<8x32xf32> to vector<1x8x32xf32>
    %c0_58 = arith.constant 0 : index
    %c0_59 = arith.constant 0 : index
    %c0_60 = arith.constant 0 : index
    %144 = vector.load %arg16[%c0_58, %c0_59, %c0_60] : memref<1x8x32xf32, #tpu.memory_space<vmem>>, vector<1x8x32xf32>
    tpu.vector_store %arg16[%c0_58, %c0_59, %c0_60], %143 {strides = array<i32>} : memref<1x8x32xf32, #tpu.memory_space<vmem>>, vector<1x8x32xf32>,
    return
  }
  func.func @transform_0(%arg0: i32) -> (i32, i32, i32) {
    %c0_i32 = arith.constant 0 : i32
    %c0_i32_0 = arith.constant 0 : i32
    %c0_i32_1 = arith.constant 0 : i32
    return %arg0, %c0_i32, %c0_i32_0 : i32, i32, i32
  }
  func.func @transform_1(%arg0: i32) -> (i32, i32, i32) {
    %c0_i32 = arith.constant 0 : i32
    %c0_i32_0 = arith.constant 0 : i32
    %c0_i32_1 = arith.constant 0 : i32
    return %arg0, %c0_i32, %c0_i32_0 : i32, i32, i32
  }
  func.func @transform_2(%arg0: i32) -> (i32, i32, i32) {
    %c0_i32 = arith.constant 0 : i32
    %c0_i32_0 = arith.constant 0 : i32
    %c0_i32_1 = arith.constant 0 : i32
    return %arg0, %c0_i32, %c0_i32_0 : i32, i32, i32
  }
  func.func @transform_3(%arg0: i32) -> (i32, i32) {
    %c0_i32 = arith.constant 0 : i32
    %c0_i32_0 = arith.constant 0 : i32
    %c0_i32_1 = arith.constant 0 : i32
    return %c0_i32, %c0_i32_0 : i32, i32
  }
  func.func @transform_4(%arg0: i32) -> (i32, i32) {
    %c0_i32 = arith.constant 0 : i32
    %c0_i32_0 = arith.constant 0 : i32
    %c0_i32_1 = arith.constant 0 : i32
    return %c0_i32, %c0_i32_0 : i32, i32
  }
  func.func @transform_5(%arg0: i32) -> (i32, i32) {
    %c0_i32 = arith.constant 0 : i32
    %c0_i32_0 = arith.constant 0 : i32
    %c0_i32_1 = arith.constant 0 : i32
    return %c0_i32, %c0_i32_0 : i32, i32
  }
  func.func @transform_6(%arg0: i32) -> (i32, i32) {
    %c0_i32 = arith.constant 0 : i32
    %c0_i32_0 = arith.constant 0 : i32
    %c0_i32_1 = arith.constant 0 : i32
    return %c0_i32, %c0_i32_0 : i32, i32
  }
  func.func @transform_7(%arg0: i32) -> (i32, i32) {
    %c0_i32 = arith.constant 0 : i32
    %c0_i32_0 = arith.constant 0 : i32
    %c0_i32_1 = arith.constant 0 : i32
    return %c0_i32, %c0_i32_0 : i32, i32
  }
  func.func @transform_8(%arg0: i32) -> (i32, i32) {
    %c0_i32 = arith.constant 0 : i32
    %c0_i32_0 = arith.constant 0 : i32
    %c0_i32_1 = arith.constant 0 : i32
    return %c0_i32, %c0_i32_0 : i32, i32
  }
  func.func @transform_9(%arg0: i32) -> (i32, i32) {
    %c0_i32 = arith.constant 0 : i32
    %c0_i32_0 = arith.constant 0 : i32
    %c0_i32_1 = arith.constant 0 : i32
    return %c0_i32, %c0_i32_0 : i32, i32
  }
  func.func @transform_10(%arg0: i32) -> (i32, i32) {
    %c0_i32 = arith.constant 0 : i32
    %c0_i32_0 = arith.constant 0 : i32
    %c0_i32_1 = arith.constant 0 : i32
    return %c0_i32, %c0_i32_0 : i32, i32
  }
  func.func @transform_11(%arg0: i32) -> (i32, i32) {
    %c0_i32 = arith.constant 0 : i32
    %c0_i32_0 = arith.constant 0 : i32
    %c0_i32_1 = arith.constant 0 : i32
    return %c0_i32, %c0_i32_0 : i32, i32
  }
  func.func @transform_12(%arg0: i32) -> (i32, i32) {
    %c0_i32 = arith.constant 0 : i32
    %c0_i32_0 = arith.constant 0 : i32
    %c0_i32_1 = arith.constant 0 : i32
    return %c0_i32, %c0_i32_0 : i32, i32
  }
  func.func @transform_13(%arg0: i32) -> (i32, i32) {
    %c0_i32 = arith.constant 0 : i32
    %c0_i32_0 = arith.constant 0 : i32
    %c0_i32_1 = arith.constant 0 : i32
    return %c0_i32, %c0_i32_0 : i32, i32
  }
  func.func @transform_14(%arg0: i32) -> (i32, i32) {
    %c0_i32 = arith.constant 0 : i32
    %c0_i32_0 = arith.constant 0 : i32
    %c0_i32_1 = arith.constant 0 : i32
    return %c0_i32, %c0_i32_0 : i32, i32
  }
  func.func @transform_15(%arg0: i32) -> (i32, i32, i32) {
    %c0_i32 = arith.constant 0 : i32
    %c0_i32_0 = arith.constant 0 : i32
    %c0_i32_1 = arith.constant 0 : i32
    return %arg0, %c0_i32, %c0_i32_0 : i32, i32, i32
  }
}

</mosaic_0001>

<llo_original>
// kernel: tpu_custom_call.1
$region0: #{tpu_custom_call.1}
  #allocation0 [shape = 'u32[]', space=smem, size = 0x4, offset = 0x4, fixed_abs, tag = 'smem constant byte address 0x4 - core index']
  #allocation1 [shape = 'u32[144,128]{1,0:T(1,128)}', space=vmem, size = 0x12000, scoped, tag = 'internal scratch']
  %s0 = inlined_call_operand.hbm [shape: f32[2,8,32], index: 0, kind: input, shape index: {}]
  %s1 = inlined_call_operand.hbm [shape: f32[2,1,8], index: 1, kind: input, shape index: {}]
  %s2 = inlined_call_operand.hbm [shape: f32[2,8,1], index: 2, kind: input, shape index: {}]
  %s3 = inlined_call_operand.hbm [shape: bf16[32,96], index: 3, kind: input, shape index: {}]
  %s4 = inlined_call_operand.hbm [shape: f32[1,96], index: 4, kind: input, shape index: {}]
  %s5 = inlined_call_operand.hbm [shape: bf16[32,32], index: 5, kind: input, shape index: {}]
  %s6 = inlined_call_operand.hbm [shape: f32[1,32], index: 6, kind: input, shape index: {}]
  %s7 = inlined_call_operand.hbm [shape: f32[1,32], index: 7, kind: input, shape index: {}]
  %s8 = inlined_call_operand.hbm [shape: f32[1,32], index: 8, kind: input, shape index: {}]
  %s9 = inlined_call_operand.hbm [shape: bf16[96,64], index: 9, kind: input, shape index: {}]
  %s10 = inlined_call_operand.hbm [shape: f32[1,64], index: 10, kind: input, shape index: {}]
  %s11 = inlined_call_operand.hbm [shape: bf16[192,32], index: 11, kind: input, shape index: {}]
  %s12 = inlined_call_operand.hbm [shape: f32[1,32], index: 12, kind: input, shape index: {}]
  %s13 = inlined_call_operand.hbm [shape: f32[1,32], index: 13, kind: input, shape index: {}]
  %s14 = inlined_call_operand.hbm [shape: f32[1,32], index: 14, kind: input, shape index: {}]
  %s15 = inlined_call_operand.hbm [shape: f32[2,8,32], index: 15, kind: output, shape index: {}]
  %s16 = sld [smem:[#allocation0]]
  $region153: #{tpu_custom_call.1} parent=0
    _
  %s18 = ssub.s32 1, %s16
  %s19 = scalar_select 0, %s18, %s16
  $region1: #{tpu_custom_call.1} parent=0
    #allocation2 [shape = 'u8[8192]{0}', space=vmem, size = 0x2000, scoped, tag = 'input window, operand 0']
    #allocation3 [shape = 's32[2]{0}', space=sflag, size = 0x8, scoped, tag = 'scoped memory for tpu_custom_call.1']
    #allocation4 [shape = 's32[2]{0}', space=sflag, size = 0x8, scoped, tag = 'scoped memory for tpu_custom_call.1']
    #allocation5 [shape = 'u8[1024]{0}', space=vmem, size = 0x400, scoped, tag = 'input window, operand 1']
    #allocation6 [shape = 's32[2]{0}', space=sflag, size = 0x8, scoped, tag = 'scoped memory for tpu_custom_call.1']
    #allocation7 [shape = 'u8[8192]{0}', space=vmem, size = 0x2000, scoped, tag = 'input window, operand 2']
    #allocation8 [shape = 'u8[8192]{0}', space=vmem, size = 0x2000, scoped, tag = 'input window, operand 3, single buffered']
    #allocation9 [shape = 's32[1]{0}', space=sflag, size = 0x4, scoped, tag = 'scoped memory for tpu_custom_call.1']
    #allocation10 [shape = 'u8[512]{0}', space=vmem, size = 0x400, scoped, tag = 'input window, operand 4, single buffered']
    #allocation11 [shape = 'u8[8192]{0}', space=vmem, size = 0x2000, scoped, tag = 'input window, operand 5, single buffered']
    #allocation12 [shape = 's32[1]{0}', space=sflag, size = 0x4, scoped, tag = 'scoped memory for tpu_custom_call.1']
    #allocation13 [shape = 'u8[512]{0}', space=vmem, size = 0x400, scoped, tag = 'input window, operand 6, single buffered']
    #allocation14 [shape = 'u8[512]{0}', space=vmem, size = 0x400, scoped, tag = 'input window, operand 7, single buffered']
    #allocation15 [shape = 's32[1]{0}', space=sflag, size = 0x4, scoped, tag = 'scoped memory for tpu_custom_call.1']
    #allocation16 [shape = 'u8[512]{0}', space=vmem, size = 0x400, scoped, tag = 'input window, operand 8, single buffered']
    #allocation17 [shape = 'u8[24576]{0}', space=vmem, size = 0x6000, scoped, tag = 'input window, operand 9, single buffered']
    #allocation18 [shape = 's32[1]{0}', space=sflag, size = 0x4, scoped, tag = 'scoped memory for tpu_custom_call.1']
    #allocation19 [shape = 'u8[512]{0}', space=vmem, size = 0x400, scoped, tag = 'input window, operand 10, single buffered']
    #allocation20 [shape = 'u8[49152]{0}', space=vmem, size = 0xc000, scoped, tag = 'input window, operand 11, single buffered']
    #allocation21 [shape = 's32[1]{0}', space=sflag, size = 0x4, scoped, tag = 'scoped memory for tpu_custom_call.1']
    #allocation22 [shape = 'u8[512]{0}', space=vmem, size = 0x400, scoped, tag = 'input window, operand 12, single buffered']
    #allocation23 [shape = 'u8[512]{0}', space=vmem, size = 0x400, scoped, tag = 'input window, operand 13, single buffered']
    #allocation24 [shape = 's32[1]{0}', space=sflag, size = 0x4, scoped, tag = 'scoped memory for tpu_custom_call.1']
    #allocation25 [shape = 'u8[512]{0}', space=vmem, size = 0x400, scoped, tag = 'input window, operand 14, single buffered']
    #allocation26 [shape = 'u8[8192]{0}', space=vmem, size = 0x2000, scoped, tag = 'output window, operand 0']
    %20 = vsyncpa [#allocation3], 0
    %s21 = scalar_lea.sflag [#allocation3], 1
    %22 = vsyncpa %s21, 0
    %23 = vsyncpa [#allocation6], 0
    %s24 = scalar_lea.sflag [#allocation6], 1
    %25 = vsyncpa %s24, 0
    %26 = vsyncpa [#allocation9], 0
    %27 = vsyncpa [#allocation12], 0
    %28 = vsyncpa [#allocation15], 0
    %29 = vsyncpa [#allocation18], 0
    %30 = vsyncpa [#allocation21], 0
    %31 = vsyncpa [#allocation24], 0
    %32 = vsyncpa [#allocation4], 0
    %s33 = scalar_lea.sflag [#allocation4], 1
    %34 = vsyncpa %s33, 0
    loop: start=0, step=1, limit=4
    $region2: #{tpu_custom_call.1} parent=1 // loop_pre_header
      _
    $region3: #{tpu_custom_call.1} parent=1 // loop_header
      %s36 = sphi 0, %s40
      %p37 = scmp.ge.s32.totalorder %s36, 4
      %s46 = sphi 0, %s48
      %s49 = sphi 0, %s46
      %s50 = sphi 0, %s49
      %s66 = sphi 0, %s50
      %s72 = sphi 0, %s74
      %s75 = sphi 0, %s72
      %s76 = sphi 0, %s75
      %s92 = sphi 0, %s76
      %s98 = sphi 0, %s100
      %s101 = sphi 0, %s98
      %s102 = sphi 0, %s101
      %s118 = sphi 0, %s102
      %s122 = sphi 0, %s122
      %s124 = sphi 0, %s122
      %s125 = sphi 0, %s124
      %s139 = sphi 0, %s125
      %s143 = sphi 0, %s143
      %s145 = sphi 0, %s143
      %s146 = sphi 0, %s145
      %s160 = sphi 0, %s146
      %s164 = sphi 0, %s164
      %s166 = sphi 0, %s164
      %s167 = sphi 0, %s166
      %s181 = sphi 0, %s167
      %s185 = sphi 0, %s185
      %s187 = sphi 0, %s185
      %s188 = sphi 0, %s187
      %s202 = sphi 0, %s188
      %s206 = sphi 0, %s206
      %s208 = sphi 0, %s206
      %s209 = sphi 0, %s208
      %s223 = sphi 0, %s209
      %s227 = sphi 0, %s227
      %s229 = sphi 0, %s227
      %s230 = sphi 0, %s229
      %s244 = sphi 0, %s230
      %s248 = sphi 0, %s248
      %s250 = sphi 0, %s248
      %s251 = sphi 0, %s250
      %s265 = sphi 0, %s251
      %s269 = sphi 0, %s269
      %s271 = sphi 0, %s269
      %s272 = sphi 0, %s271
      %s286 = sphi 0, %s272
      %s290 = sphi 0, %s290
      %s292 = sphi 0, %s290
      %s293 = sphi 0, %s292
      %s307 = sphi 0, %s293
      %s311 = sphi 0, %s311
      %s313 = sphi 0, %s311
      %s314 = sphi 0, %s313
      %s328 = sphi 0, %s314
      %s332 = sphi 0, %s332
      %s334 = sphi 0, %s332
      %s335 = sphi 0, %s334
      %s349 = sphi 0, %s335
      %s353 = sphi 0, %s353
      %s355 = sphi 0, %s353
      %s356 = sphi 0, %s355
      %s370 = sphi 0, %s356
      %s376 = sphi 0, %s378
      %s379 = sphi 0, %s376
      %s380 = sphi 0, %s379
      %s396 = sphi 0, %s380
    $region4: #{tpu_custom_call.1} parent=1 // loop_header_branch
      %39 = sbr.rel (%p37) target = $region8
    $region5: #{tpu_custom_call.1} parent=1 // loop_body
      %s41 = ssub.s32 %s36, 1
      %s42 = ssub.s32 %s36, 2
      %s43 = sadd.s32 %s36, 1
      %s44 = ssub.s32 %s36, %s43
      %p45 = scmp.eq.s32.totalorder %s44, 0
      %s47 = sadd.s32 %s46, 1
      %s48 = scalar_select %p45, %s46, %s47
      %p51 = pneg %p45
      %p52 = scmp.eq.s32.totalorder %s36, 1
      %p53 = por %p51, %p52
      %p54 = scmp.ne.s32.totalorder %s46, %s49
      %p55 = scmp.eq.s32.totalorder %s36, 0
      %p56 = por %p54, %p55
      %p57 = scmp.ne.s32.totalorder %s46, %s49
      %p58 = scmp.eq.s32.totalorder %s41, 1
      %p59 = por %p57, %p58
      %p60 = scmp.ne.s32.totalorder %s49, %s50
      %p61 = scmp.eq.s32.totalorder %s41, 0
      %p62 = por %p60, %p61
      %p63 = scmp.ne.s32.totalorder %s49, %s50
      %p64 = scmp.eq.s32.totalorder %s42, 1
      %p65 = por %p63, %p64
      %p67 = scmp.ne.s32.totalorder %s50, %s66
      %p68 = scmp.eq.s32.totalorder %s42, 0
      %p69 = por %p67, %p68
      %s70 = ssub.s32 %s36, %s43
      %p71 = scmp.eq.s32.totalorder %s70, 0
      %s73 = sadd.s32 %s72, 1
      %s74 = scalar_select %p71, %s72, %s73
      %p77 = pneg %p71
      %p78 = scmp.eq.s32.totalorder %s36, 1
      %p79 = por %p77, %p78
      %p80 = scmp.ne.s32.totalorder %s72, %s75
      %p81 = scmp.eq.s32.totalorder %s36, 0
      %p82 = por %p80, %p81
      %p83 = scmp.ne.s32.totalorder %s72, %s75
      %p84 = scmp.eq.s32.totalorder %s41, 1
      %p85 = por %p83, %p84
      %p86 = scmp.ne.s32.totalorder %s75, %s76
      %p87 = scmp.eq.s32.totalorder %s41, 0
      %p88 = por %p86, %p87
      %p89 = scmp.ne.s32.totalorder %s75, %s76
      %p90 = scmp.eq.s32.totalorder %s42, 1
      %p91 = por %p89, %p90
      %p93 = scmp.ne.s32.totalorder %s76, %s92
      %p94 = scmp.eq.s32.totalorder %s42, 0
      %p95 = por %p93, %p94
      %s96 = ssub.s32 %s36, %s43
      %p97 = scmp.eq.s32.totalorder %s96, 0
      %s99 = sadd.s32 %s98, 1
      %s100 = scalar_select %p97, %s98, %s99
      %p103 = pneg %p97
      %p104 = scmp.eq.s32.totalorder %s36, 1
      %p105 = por %p103, %p104
      %p106 = scmp.ne.s32.totalorder %s98, %s101
      %p107 = scmp.eq.s32.totalorder %s36, 0
      %p108 = por %p106, %p107
      %p109 = scmp.ne.s32.totalorder %s98, %s101
      %p110 = scmp.eq.s32.totalorder %s41, 1
      %p111 = por %p109, %p110
      %p112 = scmp.ne.s32.totalorder %s101, %s102
      %p113 = scmp.eq.s32.totalorder %s41, 0
      %p114 = por %p112, %p113
      %p115 = scmp.ne.s32.totalorder %s101, %s102
      %p116 = scmp.eq.s32.totalorder %s42, 1
      %p117 = por %p115, %p116
      %p119 = scmp.ne.s32.totalorder %s102, %s118
      %p120 = scmp.eq.s32.totalorder %s42, 0
      %p121 = por %p119, %p120
      %s123 = sadd.s32 %s122, 1
      %p126 = scmp.eq.s32.totalorder %s36, 1
      %p127 = scmp.ne.s32.totalorder %s122, %s124
      %p128 = scmp.eq.s32.totalorder %s36, 0
      %p129 = por %p127, %p128
      %p130 = scmp.ne.s32.totalorder %s122, %s124
      %p131 = scmp.eq.s32.totalorder %s41, 1
      %p132 = por %p130, %p131
      %p133 = scmp.ne.s32.totalorder %s124, %s125
      %p134 = scmp.eq.s32.totalorder %s41, 0
      %p135 = por %p133, %p134
      %p136 = scmp.ne.s32.totalorder %s124, %s125
      %p137 = scmp.eq.s32.totalorder %s42, 1
      %p138 = por %p136, %p137
      %p140 = scmp.ne.s32.totalorder %s125, %s139
      %p141 = scmp.eq.s32.totalorder %s42, 0
      %p142 = por %p140, %p141
      %s144 = sadd.s32 %s143, 1
      %p147 = scmp.eq.s32.totalorder %s36, 1
      %p148 = scmp.ne.s32.totalorder %s143, %s145
      %p149 = scmp.eq.s32.totalorder %s36, 0
      %p150 = por %p148, %p149
      %p151 = scmp.ne.s32.totalorder %s143, %s145
      %p152 = scmp.eq.s32.totalorder %s41, 1
      %p153 = por %p151, %p152
      %p154 = scmp.ne.s32.totalorder %s145, %s146
      %p155 = scmp.eq.s32.totalorder %s41, 0
      %p156 = por %p154, %p155
      %p157 = scmp.ne.s32.totalorder %s145, %s146
      %p158 = scmp.eq.s32.totalorder %s42, 1
      %p159 = por %p157, %p158
      %p161 = scmp.ne.s32.totalorder %s146, %s160
      %p162 = scmp.eq.s32.totalorder %s42, 0
      %p163 = por %p161, %p162
      %s165 = sadd.s32 %s164, 1
      %p168 = scmp.eq.s32.totalorder %s36, 1
      %p169 = scmp.ne.s32.totalorder %s164, %s166
      %p170 = scmp.eq.s32.totalorder %s36, 0
      %p171 = por %p169, %p170
      %p172 = scmp.ne.s32.totalorder %s164, %s166
      %p173 = scmp.eq.s32.totalorder %s41, 1
      %p174 = por %p172, %p173
      %p175 = scmp.ne.s32.totalorder %s166, %s167
      %p176 = scmp.eq.s32.totalorder %s41, 0
      %p177 = por %p175, %p176
      %p178 = scmp.ne.s32.totalorder %s166, %s167
      %p179 = scmp.eq.s32.totalorder %s42, 1
      %p180 = por %p178, %p179
      %p182 = scmp.ne.s32.totalorder %s167, %s181
      %p183 = scmp.eq.s32.totalorder %s42, 0
      %p184 = por %p182, %p183
      %s186 = sadd.s32 %s185, 1
      %p189 = scmp.eq.s32.totalorder %s36, 1
      %p190 = scmp.ne.s32.totalorder %s185, %s187
      %p191 = scmp.eq.s32.totalorder %s36, 0
      %p192 = por %p190, %p191
      %p193 = scmp.ne.s32.totalorder %s185, %s187
      %p194 = scmp.eq.s32.totalorder %s41, 1
      %p195 = por %p193, %p194
      %p196 = scmp.ne.s32.totalorder %s187, %s188
      %p197 = scmp.eq.s32.totalorder %s41, 0
      %p198 = por %p196, %p197
      %p199 = scmp.ne.s32.totalorder %s187, %s188
      %p200 = scmp.eq.s32.totalorder %s42, 1
      %p201 = por %p199, %p200
      %p203 = scmp.ne.s32.totalorder %s188, %s202
      %p204 = scmp.eq.s32.totalorder %s42, 0
      %p205 = por %p203, %p204
      %s207 = sadd.s32 %s206, 1
      %p210 = scmp.eq.s32.totalorder %s36, 1
      %p211 = scmp.ne.s32.totalorder %s206, %s208
      %p212 = scmp.eq.s32.totalorder %s36, 0
      %p213 = por %p211, %p212
      %p214 = scmp.ne.s32.totalorder %s206, %s208
      %p215 = scmp.eq.s32.totalorder %s41, 1
      %p216 = por %p214, %p215
      %p217 = scmp.ne.s32.totalorder %s208, %s209
      %p218 = scmp.eq.s32.totalorder %s41, 0
      %p219 = por %p217, %p218
      %p220 = scmp.ne.s32.totalorder %s208, %s209
      %p221 = scmp.eq.s32.totalorder %s42, 1
      %p222 = por %p220, %p221
      %p224 = scmp.ne.s32.totalorder %s209, %s223
      %p225 = scmp.eq.s32.totalorder %s42, 0
      %p226 = por %p224, %p225
      %s228 = sadd.s32 %s227, 1
      %p231 = scmp.eq.s32.totalorder %s36, 1
      %p232 = scmp.ne.s32.totalorder %s227, %s229
      %p233 = scmp.eq.s32.totalorder %s36, 0
      %p234 = por %p232, %p233
      %p235 = scmp.ne.s32.totalorder %s227, %s229
      %p236 = scmp.eq.s32.totalorder %s41, 1
      %p237 = por %p235, %p236
      %p238 = scmp.ne.s32.totalorder %s229, %s230
      %p239 = scmp.eq.s32.totalorder %s41, 0
      %p240 = por %p238, %p239
      %p241 = scmp.ne.s32.totalorder %s229, %s230
      %p242 = scmp.eq.s32.totalorder %s42, 1
      %p243 = por %p241, %p242
      %p245 = scmp.ne.s32.totalorder %s230, %s244
      %p246 = scmp.eq.s32.totalorder %s42, 0
      %p247 = por %p245, %p246
      %s249 = sadd.s32 %s248, 1
      %p252 = scmp.eq.s32.totalorder %s36, 1
      %p253 = scmp.ne.s32.totalorder %s248, %s250
      %p254 = scmp.eq.s32.totalorder %s36, 0
      %p255 = por %p253, %p254
      %p256 = scmp.ne.s32.totalorder %s248, %s250
      %p257 = scmp.eq.s32.totalorder %s41, 1
      %p258 = por %p256, %p257
      %p259 = scmp.ne.s32.totalorder %s250, %s251
      %p260 = scmp.eq.s32.totalorder %s41, 0
      %p261 = por %p259, %p260
      %p262 = scmp.ne.s32.totalorder %s250, %s251
      %p263 = scmp.eq.s32.totalorder %s42, 1
      %p264 = por %p262, %p263
      %p266 = scmp.ne.s32.totalorder %s251, %s265
      %p267 = scmp.eq.s32.totalorder %s42, 0
      %p268 = por %p266, %p267
      %s270 = sadd.s32 %s269, 1
      %p273 = scmp.eq.s32.totalorder %s36, 1
      %p274 = scmp.ne.s32.totalorder %s269, %s271
      %p275 = scmp.eq.s32.totalorder %s36, 0
      %p276 = por %p274, %p275
      %p277 = scmp.ne.s32.totalorder %s269, %s271
      %p278 = scmp.eq.s32.totalorder %s41, 1
      %p279 = por %p277, %p278
      %p280 = scmp.ne.s32.totalorder %s271, %s272
      %p281 = scmp.eq.s32.totalorder %s41, 0
      %p282 = por %p280, %p281
      %p283 = scmp.ne.s32.totalorder %s271, %s272
      %p284 = scmp.eq.s32.totalorder %s42, 1
      %p285 = por %p283, %p284
      %p287 = scmp.ne.s32.totalorder %s272, %s286
      %p288 = scmp.eq.s32.totalorder %s42, 0
      %p289 = por %p287, %p288
      %s291 = sadd.s32 %s290, 1
      %p294 = scmp.eq.s32.totalorder %s36, 1
      %p295 = scmp.ne.s32.totalorder %s290, %s292
      %p296 = scmp.eq.s32.totalorder %s36, 0
      %p297 = por %p295, %p296
      %p298 = scmp.ne.s32.totalorder %s290, %s292
      %p299 = scmp.eq.s32.totalorder %s41, 1
      %p300 = por %p298, %p299
      %p301 = scmp.ne.s32.totalorder %s292, %s293
      %p302 = scmp.eq.s32.totalorder %s41, 0
      %p303 = por %p301, %p302
      %p304 = scmp.ne.s32.totalorder %s292, %s293
      %p305 = scmp.eq.s32.totalorder %s42, 1
      %p306 = por %p304, %p305
      %p308 = scmp.ne.s32.totalorder %s293, %s307
      %p309 = scmp.eq.s32.totalorder %s42, 0
      %p310 = por %p308, %p309
      %s312 = sadd.s32 %s311, 1
      %p315 = scmp.eq.s32.totalorder %s36, 1
      %p316 = scmp.ne.s32.totalorder %s311, %s313
      %p317 = scmp.eq.s32.totalorder %s36, 0
      %p318 = por %p316, %p317
      %p319 = scmp.ne.s32.totalorder %s311, %s313
      %p320 = scmp.eq.s32.totalorder %s41, 1
      %p321 = por %p319, %p320
      %p322 = scmp.ne.s32.totalorder %s313, %s314
      %p323 = scmp.eq.s32.totalorder %s41, 0
      %p324 = por %p322, %p323
      %p325 = scmp.ne.s32.totalorder %s313, %s314
      %p326 = scmp.eq.s32.totalorder %s42, 1
      %p327 = por %p325, %p326
      %p329 = scmp.ne.s32.totalorder %s314, %s328
      %p330 = scmp.eq.s32.totalorder %s42, 0
      %p331 = por %p329, %p330
      %s333 = sadd.s32 %s332, 1
      %p336 = scmp.eq.s32.totalorder %s36, 1
      %p337 = scmp.ne.s32.totalorder %s332, %s334
      %p338 = scmp.eq.s32.totalorder %s36, 0
      %p339 = por %p337, %p338
      %p340 = scmp.ne.s32.totalorder %s332, %s334
      %p341 = scmp.eq.s32.totalorder %s41, 1
      %p342 = por %p340, %p341
      %p343 = scmp.ne.s32.totalorder %s334, %s335
      %p344 = scmp.eq.s32.totalorder %s41, 0
      %p345 = por %p343, %p344
      %p346 = scmp.ne.s32.totalorder %s334, %s335
      %p347 = scmp.eq.s32.totalorder %s42, 1
      %p348 = por %p346, %p347
      %p350 = scmp.ne.s32.totalorder %s335, %s349
      %p351 = scmp.eq.s32.totalorder %s42, 0
      %p352 = por %p350, %p351
      %s354 = sadd.s32 %s353, 1
      %p357 = scmp.eq.s32.totalorder %s36, 1
      %p358 = scmp.ne.s32.totalorder %s353, %s355
      %p359 = scmp.eq.s32.totalorder %s36, 0
      %p360 = por %p358, %p359
      %p361 = scmp.ne.s32.totalorder %s353, %s355
      %p362 = scmp.eq.s32.totalorder %s41, 1
      %p363 = por %p361, %p362
      %p364 = scmp.ne.s32.totalorder %s355, %s356
      %p365 = scmp.eq.s32.totalorder %s41, 0
      %p366 = por %p364, %p365
      %p367 = scmp.ne.s32.totalorder %s355, %s356
      %p368 = scmp.eq.s32.totalorder %s42, 1
      %p369 = por %p367, %p368
      %p371 = scmp.ne.s32.totalorder %s356, %s370
      %p372 = scmp.eq.s32.totalorder %s42, 0
      %p373 = por %p371, %p372
      %s374 = ssub.s32 %s36, %s43
      %p375 = scmp.eq.s32.totalorder %s374, 0
      %s377 = sadd.s32 %s376, 1
      %s378 = scalar_select %p375, %s376, %s377
      %p381 = pneg %p375
      %p382 = scmp.eq.s32.totalorder %s36, 1
      %p383 = por %p381, %p382
      %p384 = scmp.ne.s32.totalorder %s376, %s379
      %p385 = scmp.eq.s32.totalorder %s36, 0
      %p386 = por %p384, %p385
      %p387 = scmp.ne.s32.totalorder %s376, %s379
      %p388 = scmp.eq.s32.totalorder %s41, 1
      %p389 = por %p387, %p388
      %p390 = scmp.ne.s32.totalorder %s379, %s380
      %p391 = scmp.eq.s32.totalorder %s41, 0
      %p392 = por %p390, %p391
      %p393 = scmp.ne.s32.totalorder %s379, %s380
      %p394 = scmp.eq.s32.totalorder %s42, 1
      %p395 = por %p393, %p394
      %p397 = scmp.ne.s32.totalorder %s380, %s396
      %p398 = scmp.eq.s32.totalorder %s42, 0
      %p399 = por %p397, %p398
      %p400 = scmp.le.s32.totalorder 1, %s36
      %p401 = scmp.lt.s32.totalorder %s36, 3
      %p402 = pnand %p400, %p401
      %p403 = pneg %p402
      // Predicated region
      $region9: #{tpu_custom_call.1} parent=5 // pred_check
        _
      $region10: #{tpu_custom_call.1} parent=5 // pred_check_branch
        %405 = sbr.rel (%p402) target = $region12
      $region11: #{tpu_custom_call.1} parent=5 // pred_region
        %s406 = ssub.s32 %s36, 1
        // Predicated region
        $region13: #{tpu_custom_call.1} parent=11 // pred_check
          %p407 = pneg %p135
        $region14: #{tpu_custom_call.1} parent=11 // pred_check_branch
          %409 = sbr.rel (%p407) target = $region16
        $region15: #{tpu_custom_call.1} parent=11 // pred_region
          %s411 = ssub.s32 256, 256
          %412 = vsyncadd [#allocation9], %s411
          %s413 = sshll.u32 [#allocation8], 4
          %s414 = int_to_ptr.vmem [resolvable:$true] %s413
          %419 = dma.hbm_to_vmem [thread:$0]  %s3, 256, %s414, [#allocation9], 64, 64, 4
        $region16: #{tpu_custom_call.1} parent=11 // pred_fallthru
          _
        // Predicated region
        $region17: #{tpu_custom_call.1} parent=11 // pred_check
          %p420 = pneg %p156
        $region18: #{tpu_custom_call.1} parent=11 // pred_check_branch
          %422 = sbr.rel (%p420) target = $region20
        $region19: #{tpu_custom_call.1} parent=11 // pred_region
          %s424 = ssub.s32 16, 16
          %425 = vsyncadd [#allocation9], %s424
          %s427 = sshll.u32 [#allocation10], 4
          %s428 = int_to_ptr.vmem [resolvable:$true] %s427
          %430 = dma.hbm_to_vmem [thread:$0]  %s4, 16, %s428, [#allocation9]
        $region20: #{tpu_custom_call.1} parent=11 // pred_fallthru
          _
        // Predicated region
        $region21: #{tpu_custom_call.1} parent=11 // pred_check
          %p431 = pneg %p177
        $region22: #{tpu_custom_call.1} parent=11 // pred_check_branch
          %433 = sbr.rel (%p431) target = $region24
        $region23: #{tpu_custom_call.1} parent=11 // pred_region
          %s435 = ssub.s32 256, 256
          %436 = vsyncadd [#allocation12], %s435
          %s437 = sshll.u32 [#allocation11], 4
          %s438 = int_to_ptr.vmem [resolvable:$true] %s437
          %443 = dma.hbm_to_vmem [thread:$0]  %s5, 256, %s438, [#allocation12], 64, 64, 4
        $region24: #{tpu_custom_call.1} parent=11 // pred_fallthru
          _
        // Predicated region
        $region25: #{tpu_custom_call.1} parent=11 // pred_check
          %p444 = pneg %p198
        $region26: #{tpu_custom_call.1} parent=11 // pred_check_branch
          %446 = sbr.rel (%p444) target = $region28
        $region27: #{tpu_custom_call.1} parent=11 // pred_region
          %s448 = ssub.s32 16, 16
          %449 = vsyncadd [#allocation12], %s448
          %s451 = sshll.u32 [#allocation13], 4
          %s452 = int_to_ptr.vmem [resolvable:$true] %s451
          %454 = dma.hbm_to_vmem [thread:$0]  %s6, 16, %s452, [#allocation12]
        $region28: #{tpu_custom_call.1} parent=11 // pred_fallthru
          _
        // Predicated region
        $region29: #{tpu_custom_call.1} parent=11 // pred_check
          %p455 = pneg %p219
        $region30: #{tpu_custom_call.1} parent=11 // pred_check_branch
          %457 = sbr.rel (%p455) target = $region32
        $region31: #{tpu_custom_call.1} parent=11 // pred_region
          %s459 = ssub.s32 16, 16
          %460 = vsyncadd [#allocation15], %s459
          %s462 = sshll.u32 [#allocation14], 4
          %s463 = int_to_ptr.vmem [resolvable:$true] %s462
          %465 = dma.hbm_to_vmem [thread:$0]  %s7, 16, %s463, [#allocation15]
        $region32: #{tpu_custom_call.1} parent=11 // pred_fallthru
          _
        // Predicated region
        $region33: #{tpu_custom_call.1} parent=11 // pred_check
          %p466 = pneg %p240
        $region34: #{tpu_custom_call.1} parent=11 // pred_check_branch
          %468 = sbr.rel (%p466) target = $region36
        $region35: #{tpu_custom_call.1} parent=11 // pred_region
          %s470 = ssub.s32 16, 16
          %471 = vsyncadd [#allocation15], %s470
          %s473 = sshll.u32 [#allocation16], 4
          %s474 = int_to_ptr.vmem [resolvable:$true] %s473
          %476 = dma.hbm_to_vmem [thread:$0]  %s8, 16, %s474, [#allocation15]
        $region36: #{tpu_custom_call.1} parent=11 // pred_fallthru
          _
        // Predicated region
        $region37: #{tpu_custom_call.1} parent=11 // pred_check
          %p477 = pneg %p261
        $region38: #{tpu_custom_call.1} parent=11 // pred_check_branch
          %479 = sbr.rel (%p477) target = $region40
        $region39: #{tpu_custom_call.1} parent=11 // pred_region
          %s481 = ssub.s32 768, 768
          %482 = vsyncadd [#allocation18], %s481
          %s483 = sshll.u32 [#allocation17], 4
          %s484 = int_to_ptr.vmem [resolvable:$true] %s483
          %489 = dma.hbm_to_vmem [thread:$0]  %s9, 768, %s484, [#allocation18], 64, 64, 4
        $region40: #{tpu_custom_call.1} parent=11 // pred_fallthru
          _
        // Predicated region
        $region41: #{tpu_custom_call.1} parent=11 // pred_check
          %p490 = pneg %p282
        $region42: #{tpu_custom_call.1} parent=11 // pred_check_branch
          %492 = sbr.rel (%p490) target = $region44
        $region43: #{tpu_custom_call.1} parent=11 // pred_region
          %s494 = ssub.s32 16, 16
          %495 = vsyncadd [#allocation18], %s494
          %s497 = sshll.u32 [#allocation19], 4
          %s498 = int_to_ptr.vmem [resolvable:$true] %s497
          %500 = dma.hbm_to_vmem [thread:$0]  %s10, 16, %s498, [#allocation18]
        $region44: #{tpu_custom_call.1} parent=11 // pred_fallthru
          _
        // Predicated region
        $region45: #{tpu_custom_call.1} parent=11 // pred_check
          %p501 = pneg %p303
        $region46: #{tpu_custom_call.1} parent=11 // pred_check_branch
          %503 = sbr.rel (%p501) target = $region48
        $region47: #{tpu_custom_call.1} parent=11 // pred_region
          %s505 = ssub.s32 1536, 1536
          %506 = vsyncadd [#allocation21], %s505
          %s507 = sshll.u32 [#allocation20], 4
          %s508 = int_to_ptr.vmem [resolvable:$true] %s507
          %513 = dma.hbm_to_vmem [thread:$0]  %s11, 1536, %s508, [#allocation21], 64, 64, 4
        $region48: #{tpu_custom_call.1} parent=11 // pred_fallthru
          _
        // Predicated region
        $region49: #{tpu_custom_call.1} parent=11 // pred_check
          %p514 = pneg %p324
        $region50: #{tpu_custom_call.1} parent=11 // pred_check_branch
          %516 = sbr.rel (%p514) target = $region52
        $region51: #{tpu_custom_call.1} parent=11 // pred_region
          %s518 = ssub.s32 16, 16
          %519 = vsyncadd [#allocation21], %s518
          %s521 = sshll.u32 [#allocation22], 4
          %s522 = int_to_ptr.vmem [resolvable:$true] %s521
          %524 = dma.hbm_to_vmem [thread:$0]  %s12, 16, %s522, [#allocation21]
        $region52: #{tpu_custom_call.1} parent=11 // pred_fallthru
          _
        // Predicated region
        $region53: #{tpu_custom_call.1} parent=11 // pred_check
          %p525 = pneg %p345
        $region54: #{tpu_custom_call.1} parent=11 // pred_check_branch
          %527 = sbr.rel (%p525) target = $region56
        $region55: #{tpu_custom_call.1} parent=11 // pred_region
          %s529 = ssub.s32 16, 16
          %530 = vsyncadd [#allocation24], %s529
          %s532 = sshll.u32 [#allocation23], 4
          %s533 = int_to_ptr.vmem [resolvable:$true] %s532
          %535 = dma.hbm_to_vmem [thread:$0]  %s13, 16, %s533, [#allocation24]
        $region56: #{tpu_custom_call.1} parent=11 // pred_fallthru
          _
        // Predicated region
        $region57: #{tpu_custom_call.1} parent=11 // pred_check
          %p536 = pneg %p366
        $region58: #{tpu_custom_call.1} parent=11 // pred_check_branch
          %538 = sbr.rel (%p536) target = $region60
        $region59: #{tpu_custom_call.1} parent=11 // pred_region
          %s540 = ssub.s32 16, 16
          %541 = vsyncadd [#allocation24], %s540
          %s543 = sshll.u32 [#allocation25], 4
          %s544 = int_to_ptr.vmem [resolvable:$true] %s543
          %546 = dma.hbm_to_vmem [thread:$0]  %s14, 16, %s544, [#allocation24]
        $region60: #{tpu_custom_call.1} parent=11 // pred_fallthru
          _
      $region12: #{tpu_custom_call.1} parent=5 // pred_fallthru
        _
      %p547 = scmp.lt.s32.totalorder %s36, 2
      // Predicated region
      $region61: #{tpu_custom_call.1} parent=5 // pred_check
        %p548 = pneg %p547
      $region62: #{tpu_custom_call.1} parent=5 // pred_check_branch
        %550 = sbr.rel (%p548) target = $region64
      $region63: #{tpu_custom_call.1} parent=5 // pred_region
        // Predicated region
        $region65: #{tpu_custom_call.1} parent=63 // pred_check
          %p551 = pneg %p56
        $region66: #{tpu_custom_call.1} parent=63 // pred_check_branch
          %553 = sbr.rel (%p551) target = $region68
        $region67: #{tpu_custom_call.1} parent=63 // pred_region
          %s554 = sand.u32 %s46, 1
          %s555 = scalar_lea.sflag [#allocation3], %s554
          %s556 = sand.u32 %s46, 1
          %s557 = smul.addr %s556, 8
          %s558 = scalar_lea.vmem [#allocation2], %s557
          %s560 = ssub.s32 128, 128
          %561 = vsyncadd %s555, %s560
          %s562 = smul.addr %s36, 128
          %s563 = scalar_lea.hbm %s0, %s562
          %s565 = sshll.u32 %s558, 4
          %s566 = int_to_ptr.vmem [resolvable:$true] %s565
          %568 = dma.hbm_to_vmem [thread:$0]  %s563, 128, %s566, %s555
        $region68: #{tpu_custom_call.1} parent=63 // pred_fallthru
          _
        // Predicated region
        $region69: #{tpu_custom_call.1} parent=63 // pred_check
          %p569 = pneg %p82
        $region70: #{tpu_custom_call.1} parent=63 // pred_check_branch
          %571 = sbr.rel (%p569) target = $region72
        $region71: #{tpu_custom_call.1} parent=63 // pred_region
          %s572 = sand.u32 %s36, 1
          %s573 = scalar_lea.sflag [#allocation6], %s572
          %s574 = sand.u32 %s72, 1
          %s575 = scalar_lea.vmem [#allocation5], %s574
          %s577 = ssub.s32 16, 16
          %578 = vsyncadd %s573, %s577
          %s579 = smul.addr %s36, 16
          %s580 = scalar_lea.hbm %s1, %s579
          %s582 = sshll.u32 %s575, 4
          %s583 = int_to_ptr.vmem [resolvable:$true] %s582
          %585 = dma.hbm_to_vmem [thread:$0]  %s580, 16, %s583, %s573
        $region72: #{tpu_custom_call.1} parent=63 // pred_fallthru
          _
        // Predicated region
        $region73: #{tpu_custom_call.1} parent=63 // pred_check
          %p586 = pneg %p108
        $region74: #{tpu_custom_call.1} parent=63 // pred_check_branch
          %588 = sbr.rel (%p586) target = $region76
        $region75: #{tpu_custom_call.1} parent=63 // pred_region
          %s589 = sand.u32 %s36, 1
          %s590 = scalar_lea.sflag [#allocation6], %s589
          %s591 = sand.u32 %s98, 1
          %s592 = smul.addr %s591, 8
          %s593 = scalar_lea.vmem [#allocation7], %s592
          %s595 = ssub.s32 128, 128
          %596 = vsyncadd %s590, %s595
          %s597 = smul.addr %s36, 128
          %s598 = scalar_lea.hbm %s2, %s597
          %s600 = sshll.u32 %s593, 4
          %s601 = int_to_ptr.vmem [resolvable:$true] %s600
          %603 = dma.hbm_to_vmem [thread:$0]  %s598, 128, %s601, %s590
        $region76: #{tpu_custom_call.1} parent=63 // pred_fallthru
          _
      $region64: #{tpu_custom_call.1} parent=5 // pred_fallthru
        _
      %p604 = scmp.le.s32.totalorder 1, %s36
      %p605 = scmp.lt.s32.totalorder %s36, 3
      %p606 = pnand %p604, %p605
      %p607 = pneg %p606
      // Predicated region
      $region77: #{tpu_custom_call.1} parent=5 // pred_check
        _
      $region78: #{tpu_custom_call.1} parent=5 // pred_check_branch
        %609 = sbr.rel (%p606) target = $region80
      $region79: #{tpu_custom_call.1} parent=5 // pred_region
        %s610 = ssub.s32 %s36, 1
        %s611 = sand.u32 %s49, 1
        %s612 = scalar_lea.sflag [#allocation3], %s611
        %s613 = sand.u32 %s49, 1
        %s614 = smul.addr %s613, 8
        %s615 = scalar_lea.vmem [#allocation2], %s614
        // Predicated region
        $region81: #{tpu_custom_call.1} parent=79 // pred_check
          %p616 = pneg %p62
        $region82: #{tpu_custom_call.1} parent=79 // pred_check_branch
          %618 = sbr.rel (%p616) target = $region84
        $region83: #{tpu_custom_call.1} parent=79 // pred_region
          %619 = dma.done %s612, 128
        $region84: #{tpu_custom_call.1} parent=79 // pred_fallthru
          _
        %s620 = sand.u32 %s41, 1
        %s621 = scalar_lea.sflag [#allocation6], %s620
        %s622 = sand.u32 %s75, 1
        %s623 = scalar_lea.vmem [#allocation5], %s622
        // Predicated region
        $region85: #{tpu_custom_call.1} parent=79 // pred_check
          %p624 = pneg %p88
        $region86: #{tpu_custom_call.1} parent=79 // pred_check_branch
          %626 = sbr.rel (%p624) target = $region88
        $region87: #{tpu_custom_call.1} parent=79 // pred_region
          %627 = dma.done %s621, 16
        $region88: #{tpu_custom_call.1} parent=79 // pred_fallthru
          _
        %s628 = sand.u32 %s41, 1
        %s629 = scalar_lea.sflag [#allocation6], %s628
        %s630 = sand.u32 %s101, 1
        %s631 = smul.addr %s630, 8
        %s632 = scalar_lea.vmem [#allocation7], %s631
        // Predicated region
        $region89: #{tpu_custom_call.1} parent=79 // pred_check
          %p633 = pneg %p114
        $region90: #{tpu_custom_call.1} parent=79 // pred_check_branch
          %635 = sbr.rel (%p633) target = $region92
        $region91: #{tpu_custom_call.1} parent=79 // pred_region
          %636 = dma.done %s629, 128
        $region92: #{tpu_custom_call.1} parent=79 // pred_fallthru
          _
        // Predicated region
        $region93: #{tpu_custom_call.1} parent=79 // pred_check
          %p637 = pneg %p135
        $region94: #{tpu_custom_call.1} parent=79 // pred_check_branch
          %639 = sbr.rel (%p637) target = $region96
        $region95: #{tpu_custom_call.1} parent=79 // pred_region
          %640 = dma.done [#allocation9], 256
        $region96: #{tpu_custom_call.1} parent=79 // pred_fallthru
          _
        // Predicated region
        $region97: #{tpu_custom_call.1} parent=79 // pred_check
          %p641 = pneg %p156
        $region98: #{tpu_custom_call.1} parent=79 // pred_check_branch
          %643 = sbr.rel (%p641) target = $region100
        $region99: #{tpu_custom_call.1} parent=79 // pred_region
          %644 = dma.done [#allocation9], 16
        $region100: #{tpu_custom_call.1} parent=79 // pred_fallthru
          _
        // Predicated region
        $region101: #{tpu_custom_call.1} parent=79 // pred_check
          %p645 = pneg %p177
        $region102: #{tpu_custom_call.1} parent=79 // pred_check_branch
          %647 = sbr.rel (%p645) target = $region104
        $region103: #{tpu_custom_call.1} parent=79 // pred_region
          %648 = dma.done [#allocation12], 256
        $region104: #{tpu_custom_call.1} parent=79 // pred_fallthru
          _
        // Predicated region
        $region105: #{tpu_custom_call.1} parent=79 // pred_check
          %p649 = pneg %p198
        $region106: #{tpu_custom_call.1} parent=79 // pred_check_branch
          %651 = sbr.rel (%p649) target = $region108
        $region107: #{tpu_custom_call.1} parent=79 // pred_region
          %652 = dma.done [#allocation12], 16
        $region108: #{tpu_custom_call.1} parent=79 // pred_fallthru
          _
        // Predicated region
        $region109: #{tpu_custom_call.1} parent=79 // pred_check
          %p653 = pneg %p219
        $region110: #{tpu_custom_call.1} parent=79 // pred_check_branch
          %655 = sbr.rel (%p653) target = $region112
        $region111: #{tpu_custom_call.1} parent=79 // pred_region
          %656 = dma.done [#allocation15], 16
        $region112: #{tpu_custom_call.1} parent=79 // pred_fallthru
          _
        // Predicated region
        $region113: #{tpu_custom_call.1} parent=79 // pred_check
          %p657 = pneg %p240
        $region114: #{tpu_custom_call.1} parent=79 // pred_check_branch
          %659 = sbr.rel (%p657) target = $region116
        $region115: #{tpu_custom_call.1} parent=79 // pred_region
          %660 = dma.done [#allocation15], 16
        $region116: #{tpu_custom_call.1} parent=79 // pred_fallthru
          _
        // Predicated region
        $region117: #{tpu_custom_call.1} parent=79 // pred_check
          %p661 = pneg %p261
        $region118: #{tpu_custom_call.1} parent=79 // pred_check_branch
          %663 = sbr.rel (%p661) target = $region120
        $region119: #{tpu_custom_call.1} parent=79 // pred_region
          %664 = dma.done [#allocation18], 768
        $region120: #{tpu_custom_call.1} parent=79 // pred_fallthru
          _
        // Predicated region
        $region121: #{tpu_custom_call.1} parent=79 // pred_check
          %p665 = pneg %p282
        $region122: #{tpu_custom_call.1} parent=79 // pred_check_branch
          %667 = sbr.rel (%p665) target = $region124
        $region123: #{tpu_custom_call.1} parent=79 // pred_region
          %668 = dma.done [#allocation18], 16
        $region124: #{tpu_custom_call.1} parent=79 // pred_fallthru
          _
        // Predicated region
        $region125: #{tpu_custom_call.1} parent=79 // pred_check
          %p669 = pneg %p303
        $region126: #{tpu_custom_call.1} parent=79 // pred_check_branch
          %671 = sbr.rel (%p669) target = $region128
        $region127: #{tpu_custom_call.1} parent=79 // pred_region
          %672 = dma.done [#allocation21], 1536
        $region128: #{tpu_custom_call.1} parent=79 // pred_fallthru
          _
        // Predicated region
        $region129: #{tpu_custom_call.1} parent=79 // pred_check
          %p673 = pneg %p324
        $region130: #{tpu_custom_call.1} parent=79 // pred_check_branch
          %675 = sbr.rel (%p673) target = $region132
        $region131: #{tpu_custom_call.1} parent=79 // pred_region
          %676 = dma.done [#allocation21], 16
        $region132: #{tpu_custom_call.1} parent=79 // pred_fallthru
          _
        // Predicated region
        $region133: #{tpu_custom_call.1} parent=79 // pred_check
          %p677 = pneg %p345
        $region134: #{tpu_custom_call.1} parent=79 // pred_check_branch
          %679 = sbr.rel (%p677) target = $region136
        $region135: #{tpu_custom_call.1} parent=79 // pred_region
          %680 = dma.done [#allocation24], 16
        $region136: #{tpu_custom_call.1} parent=79 // pred_fallthru
          _
        // Predicated region
        $region137: #{tpu_custom_call.1} parent=79 // pred_check
          %p681 = pneg %p366
        $region138: #{tpu_custom_call.1} parent=79 // pred_check_branch
          %683 = sbr.rel (%p681) target = $region140
        $region139: #{tpu_custom_call.1} parent=79 // pred_region
          %684 = dma.done [#allocation24], 16
        $region140: #{tpu_custom_call.1} parent=79 // pred_fallthru
          _
        %s685 = sand.u32 %s49, 1
        %s686 = scalar_lea.sflag [#allocation3], %s685
        %s687 = sand.u32 %s49, 1
        %s688 = smul.addr %s687, 8
        %s689 = scalar_lea.vmem [#allocation2], %s688
        %p690 = pneg %p62
        %p691 = pneg %p59
        %s692 = sand.u32 %s41, 1
        %s693 = scalar_lea.sflag [#allocation6], %s692
        %s694 = sand.u32 %s75, 1
        %s695 = scalar_lea.vmem [#allocation5], %s694
        %p696 = pneg %p88
        %p697 = pneg %p85
        %s698 = sand.u32 %s41, 1
        %s699 = scalar_lea.sflag [#allocation6], %s698
        %s700 = sand.u32 %s101, 1
        %s701 = smul.addr %s700, 8
        %s702 = scalar_lea.vmem [#allocation7], %s701
        %p703 = pneg %p114
        %p704 = pneg %p111
        %p705 = pneg %p135
        %p706 = pneg %p132
        %p707 = pneg %p156
        %p708 = pneg %p153
        %p709 = pneg %p177
        %p710 = pneg %p174
        %p711 = pneg %p198
        %p712 = pneg %p195
        %p713 = pneg %p219
        %p714 = pneg %p216
        %p715 = pneg %p240
        %p716 = pneg %p237
        %p717 = pneg %p261
        %p718 = pneg %p258
        %p719 = pneg %p282
        %p720 = pneg %p279
        %p721 = pneg %p303
        %p722 = pneg %p300
        %p723 = pneg %p324
        %p724 = pneg %p321
        %p725 = pneg %p345
        %p726 = pneg %p342
        %p727 = pneg %p366
        %p728 = pneg %p363
        %p729 = pneg %p392
        %p730 = pneg %p389
        %s731 = sand.u32 %s379, 1
        %s732 = scalar_lea.sflag [#allocation4], %s731
        %s733 = sand.u32 %s379, 1
        %s734 = smul.addr %s733, 8
        %s735 = scalar_lea.vmem [#allocation26], %s734
        %v737 = vld [vmem:[%s615] sm:$0xff]
        %v738 = vld [vmem:[%s632] sm:$0xff]
        %v739 = vld [vmem:[#allocation8] sm:$0xf]
        %v740 = vld [vmem:[#allocation8 + $0x4] sm:$0xf]
        %v741 = vld [vmem:[#allocation8 + $0x8] sm:$0xf]
        %v742 = vld [vmem:[#allocation8 + $0xc] sm:$0xf]
        %v743 = vpack.c.bf16 %v737, %v737
        %v744 = vld [vmem:[#allocation10] sm:$0x1]
        %v746 = vlaneseq
        %v747 = vshrl.u32 %v746, 7
        %v748 = vsub.s32 0, %v747
        %v749 = vrot.slane %v744, %v748
        %v755 = vunpack.c.l.b16 %v739
        %v756 = vunpack.c.l.b16 %v740
        %v757 = vunpack.c.l.b16 %v741
        %v758 = vunpack.c.l.b16 %v742
        %v759 = vpack.c.b16 %v756, %v755
        %v760 = vpack.c.b16 %v758, %v757
        %vm763 = vcmask 261120
        %v765 = vsel %vm763, %v743, 0
        %767 = vmatprep.subr.bf16.mxu0 0
        %768 = vmatpush1.bf16.msra.mxu0 %v759
        %769 = vmatprep.subr.bf16.mxu0 0
        %770 = vmatpush1.bf16.msra.mxu0 %v760
        %771 = vmatprep.subr.bf16.mxu0 0
        %772 = vmatpush1.bf16.msra.mxu0 0
        %773 = vmatprep.subr.bf16.mxu0 0
        %774 = vmatpush1.bf16.msra.mxu0 0
        %775 = vmatprep.subr.bf16.mxu0 0
        %776 = vmatpush1.bf16.msra.mxu0 0
        %777 = vmatprep.subr.bf16.mxu0 0
        %778 = vmatpush1.bf16.msra.mxu0 0
        %779 = vmatprep.subr.bf16.mxu0 0
        %780 = vmatpush1.bf16.msra.mxu0 0
        %781 = vmatprep.subr.bf16.mxu0 0
        %782 = vmatpush1.bf16.msra.mxu0 0
        %783 = vmatprep.subr.bf16.mxu0 0
        %784 = vmatpush1.bf16.msra.mxu0 0
        %785 = vmatprep.subr.bf16.mxu0 0
        %786 = vmatpush1.bf16.msra.mxu0 0
        %787 = vmatprep.subr.bf16.mxu0 0
        %788 = vmatpush1.bf16.msra.mxu0 0
        %789 = vmatprep.subr.bf16.mxu0 0
        %790 = vmatpush1.bf16.msra.mxu0 0
        %791 = vmatprep.subr.bf16.mxu0 0
        %792 = vmatpush1.bf16.msra.mxu0 0
        %793 = vmatprep.subr.bf16.mxu0 0
        %794 = vmatpush1.bf16.msra.mxu0 0
        %795 = vmatprep.subr.bf16.mxu0 0
        %796 = vmatpush1.bf16.msra.mxu0 0
        %797 = vmatprep.subr.bf16.mxu0 0
        %798 = vmatpush1.bf16.msra.mxu0 0
        %799 = vmatprep.mubr.bf16.mxu0 0
        %800 = vmatmul.mubr.bf16.gmra.mrb[0].mxu0 %v765
        %v801 = vpop.f32.mrb[0].mxu0
        %v802 = vadd.f32 %v749, %v801
        %v803 = vpop.f32.mrb[0].mxu0
        %v804 = vpop.f32.mrb[0].mxu0
        %v805 = vpop.f32.mrb[0].mxu0
        %806 = vdwg.mxu0
        %v807 = vld [vmem:[%s623] sm:$0x1]
        %v808 = vpack.c.bf16 %v802, %v802
        %v810 = vlaneseq
        %v811 = vshrl.u32 %v810, 7
        %v812 = vsub.s32 0, %v811
        %v813 = vrot.slane %v807, %v812
        %816 = vrot.lane.b32.xlu0 %v808, 96
        %v817 = vpop.permute.xlu0 %816
        %vm818 = vcmask 130048
        %v820 = vsel %vm818, %v808, 0
        %v823 = vsel %vm818, %v817, 0
        %825 = vmatprep.subr.bf16.mxu0 0
        %826 = vmatpush1.bf16.xpose.msra.mxu0 %v823
        %827 = vmatprep.subr.bf16.mxu0 0
        %828 = vmatpush1.bf16.xpose.msra.mxu0 0
        %829 = vmatprep.subr.bf16.mxu0 0
        %830 = vmatpush1.bf16.xpose.msra.mxu0 0
        %831 = vmatprep.subr.bf16.mxu0 0
        %832 = vmatpush1.bf16.xpose.msra.mxu0 0
        %833 = vmatprep.subr.bf16.mxu0 0
        %834 = vmatpush1.bf16.xpose.msra.mxu0 0
        %835 = vmatprep.subr.bf16.mxu0 0
        %836 = vmatpush1.bf16.xpose.msra.mxu0 0
        %837 = vmatprep.subr.bf16.mxu0 0
        %838 = vmatpush1.bf16.xpose.msra.mxu0 0
        %839 = vmatprep.subr.bf16.mxu0 0
        %840 = vmatpush1.bf16.xpose.msra.mxu0 0
        %841 = vmatprep.subr.bf16.mxu0 0
        %842 = vmatpush1.bf16.xpose.msra.mxu0 0
        %843 = vmatprep.subr.bf16.mxu0 0
        %844 = vmatpush1.bf16.xpose.msra.mxu0 0
        %845 = vmatprep.subr.bf16.mxu0 0
        %846 = vmatpush1.bf16.xpose.msra.mxu0 0
        %847 = vmatprep.subr.bf16.mxu0 0
        %848 = vmatpush1.bf16.xpose.msra.mxu0 0
        %849 = vmatprep.subr.bf16.mxu0 0
        %850 = vmatpush1.bf16.xpose.msra.mxu0 0
        %851 = vmatprep.subr.bf16.mxu0 0
        %852 = vmatpush1.bf16.xpose.msra.mxu0 0
        %853 = vmatprep.subr.bf16.mxu0 0
        %854 = vmatpush1.bf16.xpose.msra.mxu0 0
        %855 = vmatprep.subr.bf16.mxu0 0
        %856 = vmatpush1.bf16.xpose.msra.mxu0 0
        %857 = vmatprep.mubr.bf16.mxu0 0
        %858 = vmatmul.mubr.bf16.gmra.mrb[0].mxu0 %v820
        %v859 = vpop.f32.mrb[0].mxu0
        %v860 = vadd.f32 %v813, %v859
        %v861 = vpop.f32.mrb[0].mxu0
        %v862 = vpop.f32.mrb[0].mxu0
        %v863 = vpop.f32.mrb[0].mxu0
        %864 = vdwg.mxu0
        %vm865 = vcmask 64512
        %v866 = vsel %vm865, %v860, -inf
        %867 = vmax.xlane.f32.xlu0 %v866
        %v868 = vpop.xlane.xlu0 %867
        %v869 = vsub.f32 %v860, %v868
        %v870 = vmul.f32 %v869, 1.442695
        %v871 = vpow.pop %v870
        %v872 = vpack.c.bf16 %v871, %v871
        %873 = vrot.lane.b32.xlu0 %v808, 64
        %v874 = vpop.permute.xlu0 %873
        %v876 = vsel %vm865, %v872, 0
        %vm878 = vcmask 1043456
        %v880 = vsel %vm878, %v874, 0
        %882 = vmatprep.subr.bf16.mxu0 0
        %883 = vmatpush1.bf16.msra.mxu0 %v880
        %884 = vmatprep.subr.bf16.mxu0 0
        %885 = vmatpush1.bf16.msra.mxu0 0
        %886 = vmatprep.subr.bf16.mxu0 0
        %887 = vmatpush1.bf16.msra.mxu0 0
        %888 = vmatprep.subr.bf16.mxu0 0
        %889 = vmatpush1.bf16.msra.mxu0 0
        %890 = vmatprep.subr.bf16.mxu0 0
        %891 = vmatpush1.bf16.msra.mxu0 0
        %892 = vmatprep.subr.bf16.mxu0 0
        %893 = vmatpush1.bf16.msra.mxu0 0
        %894 = vmatprep.subr.bf16.mxu0 0
        %895 = vmatpush1.bf16.msra.mxu0 0
        %896 = vmatprep.subr.bf16.mxu0 0
        %897 = vmatpush1.bf16.msra.mxu0 0
        %898 = vmatprep.subr.bf16.mxu0 0
        %899 = vmatpush1.bf16.msra.mxu0 0
        %900 = vmatprep.subr.bf16.mxu0 0
        %901 = vmatpush1.bf16.msra.mxu0 0
        %902 = vmatprep.subr.bf16.mxu0 0
        %903 = vmatpush1.bf16.msra.mxu0 0
        %904 = vmatprep.subr.bf16.mxu0 0
        %905 = vmatpush1.bf16.msra.mxu0 0
        %906 = vmatprep.subr.bf16.mxu0 0
        %907 = vmatpush1.bf16.msra.mxu0 0
        %908 = vmatprep.subr.bf16.mxu0 0
        %909 = vmatpush1.bf16.msra.mxu0 0
        %910 = vmatprep.subr.bf16.mxu0 0
        %911 = vmatpush1.bf16.msra.mxu0 0
        %912 = vmatprep.subr.bf16.mxu0 0
        %913 = vmatpush1.bf16.msra.mxu0 0
        %914 = vmatprep.mubr.bf16.mxu0 0
        %915 = vmatmul.mubr.bf16.gmra.mrb[0].mxu0 %v876
        %v916 = vpop.f32.mrb[0].mxu0
        %v917 = vadd.f32 0.0, %v916
        %v918 = vpop.f32.mrb[0].mxu0
        %v919 = vpop.f32.mrb[0].mxu0
        %v920 = vpop.f32.mrb[0].mxu0
        %921 = vdwg.mxu0
        %v922 = vsel %vm865, %v871, 0.0
        %923 = vadd.xlane.f32.xlu0 %v922
        %v924 = vpop.xlane.xlu0 %923
        %v925 = vrcp.pop %v924
        %v926 = vmul.f32 %v917, %v925
        %927 = vrot.lane.b32.xlu0 %v808, 112
        %v928 = vpop.permute.xlu0 %927
        %929 = vrot.lane.b32.xlu0 %v808, 80
        %v930 = vpop.permute.xlu0 %929
        %v932 = vsel %vm818, %v928, 0
        %v935 = vsel %vm818, %v930, 0
        %937 = vmatprep.subr.bf16.mxu0 0
        %938 = vmatpush1.bf16.xpose.msra.mxu0 %v935
        %939 = vmatprep.subr.bf16.mxu0 0
        %940 = vmatpush1.bf16.xpose.msra.mxu0 0
        %941 = vmatprep.subr.bf16.mxu0 0
        %942 = vmatpush1.bf16.xpose.msra.mxu0 0
        %943 = vmatprep.subr.bf16.mxu0 0
        %944 = vmatpush1.bf16.xpose.msra.mxu0 0
        %945 = vmatprep.subr.bf16.mxu0 0
        %946 = vmatpush1.bf16.xpose.msra.mxu0 0
        %947 = vmatprep.subr.bf16.mxu0 0
        %948 = vmatpush1.bf16.xpose.msra.mxu0 0
        %949 = vmatprep.subr.bf16.mxu0 0
        %950 = vmatpush1.bf16.xpose.msra.mxu0 0
        %951 = vmatprep.subr.bf16.mxu0 0
        %952 = vmatpush1.bf16.xpose.msra.mxu0 0
        %953 = vmatprep.subr.bf16.mxu0 0
        %954 = vmatpush1.bf16.xpose.msra.mxu0 0
        %955 = vmatprep.subr.bf16.mxu0 0
        %956 = vmatpush1.bf16.xpose.msra.mxu0 0
        %957 = vmatprep.subr.bf16.mxu0 0
        %958 = vmatpush1.bf16.xpose.msra.mxu0 0
        %959 = vmatprep.subr.bf16.mxu0 0
        %960 = vmatpush1.bf16.xpose.msra.mxu0 0
        %961 = vmatprep.subr.bf16.mxu0 0
        %962 = vmatpush1.bf16.xpose.msra.mxu0 0
        %963 = vmatprep.subr.bf16.mxu0 0
        %964 = vmatpush1.bf16.xpose.msra.mxu0 0
        %965 = vmatprep.subr.bf16.mxu0 0
        %966 = vmatpush1.bf16.xpose.msra.mxu0 0
        %967 = vmatprep.subr.bf16.mxu0 0
        %968 = vmatpush1.bf16.xpose.msra.mxu0 0
        %969 = vmatprep.mubr.bf16.mxu0 0
        %970 = vmatmul.mubr.bf16.gmra.mrb[0].mxu0 %v932
        %v971 = vpop.f32.mrb[0].mxu0
        %v972 = vadd.f32 %v813, %v971
        %v973 = vpop.f32.mrb[0].mxu0
        %v974 = vpop.f32.mrb[0].mxu0
        %v975 = vpop.f32.mrb[0].mxu0
        %976 = vdwg.mxu0
        %v977 = vsel %vm865, %v972, -inf
        %978 = vmax.xlane.f32.xlu0 %v977
        %v979 = vpop.xlane.xlu0 %978
        %v980 = vsub.f32 %v972, %v979
        %v981 = vmul.f32 %v980, 1.442695
        %v982 = vpow.pop %v981
        %v983 = vpack.c.bf16 %v982, %v982
        %984 = vrot.lane.b32.xlu0 %v808, 48
        %v985 = vpop.permute.xlu0 %984
        %v987 = vsel %vm865, %v983, 0
        %v990 = vsel %vm878, %v985, 0
        %992 = vmatprep.subr.bf16.mxu0 0
        %993 = vmatpush1.bf16.msra.mxu0 %v990
        %994 = vmatprep.subr.bf16.mxu0 0
        %995 = vmatpush1.bf16.msra.mxu0 0
        %996 = vmatprep.subr.bf16.mxu0 0
        %997 = vmatpush1.bf16.msra.mxu0 0
        %998 = vmatprep.subr.bf16.mxu0 0
        %999 = vmatpush1.bf16.msra.mxu0 0
        %1000 = vmatprep.subr.bf16.mxu0 0
        %1001 = vmatpush1.bf16.msra.mxu0 0
        %1002 = vmatprep.subr.bf16.mxu0 0
        %1003 = vmatpush1.bf16.msra.mxu0 0
        %1004 = vmatprep.subr.bf16.mxu0 0
        %1005 = vmatpush1.bf16.msra.mxu0 0
        %1006 = vmatprep.subr.bf16.mxu0 0
        %1007 = vmatpush1.bf16.msra.mxu0 0
        %1008 = vmatprep.subr.bf16.mxu0 0
        %1009 = vmatpush1.bf16.msra.mxu0 0
        %1010 = vmatprep.subr.bf16.mxu0 0
        %1011 = vmatpush1.bf16.msra.mxu0 0
        %1012 = vmatprep.subr.bf16.mxu0 0
        %1013 = vmatpush1.bf16.msra.mxu0 0
        %1014 = vmatprep.subr.bf16.mxu0 0
        %1015 = vmatpush1.bf16.msra.mxu0 0
        %1016 = vmatprep.subr.bf16.mxu0 0
        %1017 = vmatpush1.bf16.msra.mxu0 0
        %1018 = vmatprep.subr.bf16.mxu0 0
        %1019 = vmatpush1.bf16.msra.mxu0 0
        %1020 = vmatprep.subr.bf16.mxu0 0
        %1021 = vmatpush1.bf16.msra.mxu0 0
        %1022 = vmatprep.subr.bf16.mxu0 0
        %1023 = vmatpush1.bf16.msra.mxu0 0
        %1024 = vmatprep.mubr.bf16.mxu0 0
        %1025 = vmatmul.mubr.bf16.gmra.mrb[0].mxu0 %v987
        %v1026 = vpop.f32.mrb[0].mxu0
        %v1027 = vadd.f32 0.0, %v1026
        %v1028 = vpop.f32.mrb[0].mxu0
        %v1029 = vpop.f32.mrb[0].mxu0
        %v1030 = vpop.f32.mrb[0].mxu0
        %1031 = vdwg.mxu0
        %v1032 = vsel %vm865, %v982, 0.0
        %1033 = vadd.xlane.f32.xlu0 %v1032
        %v1034 = vpop.xlane.xlu0 %1033
        %v1035 = vrcp.pop %v1034
        %v1036 = vmul.f32 %v1027, %v1035
        %1038 = vrot.lane.b32.xlu0 %v1036, 16
        %v1039 = vpop.permute.xlu0 %1038
        %v1041 = vsel %vm818, %v926, %v1039
        %v1042 = vld [vmem:[#allocation11] sm:$0xf]
        %v1043 = vld [vmem:[#allocation11 + $0x4] sm:$0xf]
        %v1044 = vld [vmem:[#allocation11 + $0x8] sm:$0xf]
        %v1045 = vld [vmem:[#allocation11 + $0xc] sm:$0xf]
        %v1046 = vpack.c.bf16 %v1041, %v1041
        %v1047 = vld [vmem:[#allocation13] sm:$0x1]
        %v1049 = vlaneseq
        %v1050 = vshrl.u32 %v1049, 7
        %v1051 = vsub.s32 0, %v1050
        %v1052 = vrot.slane %v1047, %v1051
        %v1058 = vunpack.c.l.b16 %v1042
        %v1059 = vunpack.c.l.b16 %v1043
        %v1060 = vunpack.c.l.b16 %v1044
        %v1061 = vunpack.c.l.b16 %v1045
        %v1062 = vpack.c.b16 %v1059, %v1058
        %v1063 = vpack.c.b16 %v1061, %v1060
        %v1067 = vsel %vm763, %v1046, 0
        %1069 = vmatprep.subr.bf16.mxu0 0
        %1070 = vmatpush1.bf16.msra.mxu0 %v1062
        %1071 = vmatprep.subr.bf16.mxu0 0
        %1072 = vmatpush1.bf16.msra.mxu0 %v1063
        %1073 = vmatprep.subr.bf16.mxu0 0
        %1074 = vmatpush1.bf16.msra.mxu0 0
        %1075 = vmatprep.subr.bf16.mxu0 0
        %1076 = vmatpush1.bf16.msra.mxu0 0
        %1077 = vmatprep.subr.bf16.mxu0 0
        %1078 = vmatpush1.bf16.msra.mxu0 0
        %1079 = vmatprep.subr.bf16.mxu0 0
        %1080 = vmatpush1.bf16.msra.mxu0 0
        %1081 = vmatprep.subr.bf16.mxu0 0
        %1082 = vmatpush1.bf16.msra.mxu0 0
        %1083 = vmatprep.subr.bf16.mxu0 0
        %1084 = vmatpush1.bf16.msra.mxu0 0
        %1085 = vmatprep.subr.bf16.mxu0 0
        %1086 = vmatpush1.bf16.msra.mxu0 0
        %1087 = vmatprep.subr.bf16.mxu0 0
        %1088 = vmatpush1.bf16.msra.mxu0 0
        %1089 = vmatprep.subr.bf16.mxu0 0
        %1090 = vmatpush1.bf16.msra.mxu0 0
        %1091 = vmatprep.subr.bf16.mxu0 0
        %1092 = vmatpush1.bf16.msra.mxu0 0
        %1093 = vmatprep.subr.bf16.mxu0 0
        %1094 = vmatpush1.bf16.msra.mxu0 0
        %1095 = vmatprep.subr.bf16.mxu0 0
        %1096 = vmatpush1.bf16.msra.mxu0 0
        %1097 = vmatprep.subr.bf16.mxu0 0
        %1098 = vmatpush1.bf16.msra.mxu0 0
        %1099 = vmatprep.subr.bf16.mxu0 0
        %1100 = vmatpush1.bf16.msra.mxu0 0
        %1101 = vmatprep.mubr.bf16.mxu0 0
        %1102 = vmatmul.mubr.bf16.gmra.mrb[0].mxu0 %v1067
        %v1103 = vpop.f32.mrb[0].mxu0
        %v1104 = vadd.f32 %v1052, %v1103
        %v1105 = vpop.f32.mrb[0].mxu0
        %v1106 = vpop.f32.mrb[0].mxu0
        %v1107 = vpop.f32.mrb[0].mxu0
        %1108 = vdwg.mxu0
        %v1109 = vadd.f32 %v1104, %v737
        %v1110 = vld [vmem:[#allocation14] sm:$0x1]
        %v1111 = vld [vmem:[#allocation16] sm:$0x1]
        %v1112 = vsel %vm763, %v1109, 0.0
        %1113 = vadd.xlane.f32.xlu0 %v1112
        %v1114 = vpop.xlane.xlu0 %1113
        %v1115 = vrcp.pop 32.0
        %v1116 = vmul.f32 %v1114, %v1115
        %v1117 = vsub.f32 %v1109, %v1116
        %v1118 = vmul.f32 %v1117, %v1117
        %v1119 = vsel %vm763, %v1118, 0.0
        %1120 = vadd.xlane.f32.xlu0 %v1119
        %v1121 = vpop.xlane.xlu0 %1120
        %v1122 = vmul.f32 %v1121, %v1115
        %v1123 = vadd.f32 %v1122, 1e-05
        %v1124 = vrsqrt.pop %v1123
        %v1125 = vmul.f32 %v1117, %v1124
        %v1127 = vlaneseq
        %v1128 = vshrl.u32 %v1127, 7
        %v1129 = vsub.s32 0, %v1128
        %v1130 = vrot.slane %v1110, %v1129
        %v1132 = vmul.f32 %v1125, %v1130
        %v1134 = vlaneseq
        %v1135 = vshrl.u32 %v1134, 7
        %v1136 = vsub.s32 0, %v1135
        %v1137 = vrot.slane %v1111, %v1136
        %v1139 = vadd.f32 %v1132, %v1137
        %1141 = vset.pattern.permute.xlu0 0
        %1142 = vperm.xlu0 %1141, %v738
        %v1143 = vpop.permute.xlu0 %1142
        %v1145 = vmul.f32 %v1139, %v1143
        %v1147 = vrot.slane %v1145, 7
        %vm1149 = vcmask 1040384
        %v1150 = vsel %vm1149, 0.0, %v1147
        %v1151 = vrot.slane %v1145, 1
        %vm1153 = vcmask 1046528
        %v1154 = vsel %vm1153, %v1151, 0.0
        %1155 = vrot.lane.b32.xlu0 %v1145, 32
        %v1156 = vpop.permute.xlu0 %1155
        %1159 = vrot.lane.b32.xlu0 %v1154, 64
        %v1160 = vpop.permute.xlu0 %1159
        %v1162 = vsel %vm763, %v1150, %v1156
        %vm1163 = vcmask 523264
        %v1164 = vsel %vm1163, %v1162, %v1160
        %v1165 = vld [vmem:[#allocation17] sm:$0xf]
        %v1166 = vld [vmem:[#allocation17 + $0x4] sm:$0xf]
        %v1167 = vld [vmem:[#allocation17 + $0x8] sm:$0xf]
        %v1168 = vld [vmem:[#allocation17 + $0xc] sm:$0xf]
        %v1169 = vld [vmem:[#allocation17 + $0x10] sm:$0xf]
        %v1170 = vld [vmem:[#allocation17 + $0x14] sm:$0xf]
        %v1171 = vld [vmem:[#allocation17 + $0x18] sm:$0xf]
        %v1172 = vld [vmem:[#allocation17 + $0x1c] sm:$0xf]
        %v1173 = vld [vmem:[#allocation17 + $0x20] sm:$0xf]
        %v1174 = vld [vmem:[#allocation17 + $0x24] sm:$0xf]
        %v1175 = vld [vmem:[#allocation17 + $0x28] sm:$0xf]
        %v1176 = vld [vmem:[#allocation17 + $0x2c] sm:$0xf]
        %v1177 = vpack.c.bf16 %v1164, %v1164
        %v1178 = vld [vmem:[#allocation19] sm:$0x1]
        %v1180 = vlaneseq
        %v1181 = vshrl.u32 %v1180, 7
        %v1182 = vsub.s32 0, %v1181
        %v1183 = vrot.slane %v1178, %v1182
        %v1197 = vunpack.c.l.b16 %v1165
        %v1198 = vunpack.c.l.b16 %v1166
        %v1199 = vunpack.c.l.b16 %v1167
        %v1200 = vunpack.c.l.b16 %v1168
        %v1201 = vunpack.c.l.b16 %v1169
        %v1202 = vunpack.c.l.b16 %v1170
        %v1203 = vunpack.c.l.b16 %v1171
        %v1204 = vunpack.c.l.b16 %v1172
        %v1205 = vunpack.c.l.b16 %v1173
        %v1206 = vunpack.c.l.b16 %v1174
        %v1207 = vunpack.c.l.b16 %v1175
        %v1208 = vunpack.c.l.b16 %v1176
        %v1209 = vpack.c.b16 %v1198, %v1197
        %v1210 = vpack.c.b16 %v1200, %v1199
        %v1211 = vpack.c.b16 %v1202, %v1201
        %v1212 = vpack.c.b16 %v1204, %v1203
        %v1213 = vpack.c.b16 %v1206, %v1205
        %v1214 = vpack.c.b16 %v1208, %v1207
        %vm1221 = vcmask 785408
        %v1223 = vsel %vm1221, %v1177, 0
        %1225 = vmatprep.subr.bf16.mxu0 0
        %1226 = vmatpush1.bf16.msra.mxu0 %v1209
        %1227 = vmatprep.subr.bf16.mxu0 0
        %1228 = vmatpush1.bf16.msra.mxu0 %v1210
        %1229 = vmatprep.subr.bf16.mxu0 0
        %1230 = vmatpush1.bf16.msra.mxu0 %v1211
        %1231 = vmatprep.subr.bf16.mxu0 0
        %1232 = vmatpush1.bf16.msra.mxu0 %v1212
        %1233 = vmatprep.subr.bf16.mxu0 0
        %1234 = vmatpush1.bf16.msra.mxu0 %v1213
        %1235 = vmatprep.subr.bf16.mxu0 0
        %1236 = vmatpush1.bf16.msra.mxu0 %v1214
        %1237 = vmatprep.subr.bf16.mxu0 0
        %1238 = vmatpush1.bf16.msra.mxu0 0
        %1239 = vmatprep.subr.bf16.mxu0 0
        %1240 = vmatpush1.bf16.msra.mxu0 0
        %1241 = vmatprep.subr.bf16.mxu0 0
        %1242 = vmatpush1.bf16.msra.mxu0 0
        %1243 = vmatprep.subr.bf16.mxu0 0
        %1244 = vmatpush1.bf16.msra.mxu0 0
        %1245 = vmatprep.subr.bf16.mxu0 0
        %1246 = vmatpush1.bf16.msra.mxu0 0
        %1247 = vmatprep.subr.bf16.mxu0 0
        %1248 = vmatpush1.bf16.msra.mxu0 0
        %1249 = vmatprep.subr.bf16.mxu0 0
        %1250 = vmatpush1.bf16.msra.mxu0 0
        %1251 = vmatprep.subr.bf16.mxu0 0
        %1252 = vmatpush1.bf16.msra.mxu0 0
        %1253 = vmatprep.subr.bf16.mxu0 0
        %1254 = vmatpush1.bf16.msra.mxu0 0
        %1255 = vmatprep.subr.bf16.mxu0 0
        %1256 = vmatpush1.bf16.msra.mxu0 0
        %1257 = vmatprep.mubr.bf16.mxu0 0
        %1258 = vmatmul.mubr.bf16.gmra.mrb[0].mxu0 %v1223
        %v1259 = vpop.f32.mrb[0].mxu0
        %v1260 = vadd.f32 %v1183, %v1259
        %v1261 = vpop.f32.mrb[0].mxu0
        %v1262 = vpop.f32.mrb[0].mxu0
        %v1263 = vpop.f32.mrb[0].mxu0
        %1264 = vdwg.mxu0
        %v1265 = vmax.f32 %v1260, 0.0
        %v1267 = vrot.slane %v1265, 7
        %v1269 = vsel %vm1149, 0.0, %v1267
        %v1270 = vrot.slane %v1265, 1
        %v1272 = vsel %vm1153, %v1270, 0.0
        %1273 = vrot.lane.b32.xlu0 %v1265, 64
        %v1274 = vpop.permute.xlu0 %1273
        %v1276 = vsel %vm1163, %v1269, %v1274
        %v1277 = vld [vmem:[#allocation20] sm:$0xf]
        %v1278 = vld [vmem:[#allocation20 + $0x4] sm:$0xf]
        %v1279 = vld [vmem:[#allocation20 + $0x8] sm:$0xf]
        %v1280 = vld [vmem:[#allocation20 + $0xc] sm:$0xf]
        %v1281 = vld [vmem:[#allocation20 + $0x10] sm:$0xf]
        %v1282 = vld [vmem:[#allocation20 + $0x14] sm:$0xf]
        %v1283 = vld [vmem:[#allocation20 + $0x18] sm:$0xf]
        %v1284 = vld [vmem:[#allocation20 + $0x1c] sm:$0xf]
        %v1285 = vld [vmem:[#allocation20 + $0x20] sm:$0xf]
        %v1286 = vld [vmem:[#allocation20 + $0x24] sm:$0xf]
        %v1287 = vld [vmem:[#allocation20 + $0x28] sm:$0xf]
        %v1288 = vld [vmem:[#allocation20 + $0x2c] sm:$0xf]
        %v1289 = vld [vmem:[#allocation20 + $0x30] sm:$0xf]
        %v1290 = vld [vmem:[#allocation20 + $0x34] sm:$0xf]
        %v1291 = vld [vmem:[#allocation20 + $0x38] sm:$0xf]
        %v1292 = vld [vmem:[#allocation20 + $0x3c] sm:$0xf]
        %v1293 = vld [vmem:[#allocation20 + $0x40] sm:$0xf]
        %v1294 = vld [vmem:[#allocation20 + $0x44] sm:$0xf]
        %v1295 = vld [vmem:[#allocation20 + $0x48] sm:$0xf]
        %v1296 = vld [vmem:[#allocation20 + $0x4c] sm:$0xf]
        %v1297 = vld [vmem:[#allocation20 + $0x50] sm:$0xf]
        %v1298 = vld [vmem:[#allocation20 + $0x54] sm:$0xf]
        %v1299 = vld [vmem:[#allocation20 + $0x58] sm:$0xf]
        %v1300 = vld [vmem:[#allocation20 + $0x5c] sm:$0xf]
        %v1301 = vpack.c.bf16 %v1276, %v1276
        %v1302 = vpack.c.bf16 %v1272, %v1272
        %v1303 = vld [vmem:[#allocation22] sm:$0x1]
        %v1305 = vlaneseq
        %v1306 = vshrl.u32 %v1305, 7
        %v1307 = vsub.s32 0, %v1306
        %v1308 = vrot.slane %v1303, %v1307
        %v1334 = vunpack.c.l.b16 %v1277
        %v1335 = vunpack.c.l.b16 %v1278
        %v1336 = vunpack.c.l.b16 %v1279
        %v1337 = vunpack.c.l.b16 %v1280
        %v1338 = vunpack.c.l.b16 %v1281
        %v1339 = vunpack.c.l.b16 %v1282
        %v1340 = vunpack.c.l.b16 %v1283
        %v1341 = vunpack.c.l.b16 %v1284
        %v1342 = vunpack.c.l.b16 %v1285
        %v1343 = vunpack.c.l.b16 %v1286
        %v1344 = vunpack.c.l.b16 %v1287
        %v1345 = vunpack.c.l.b16 %v1288
        %v1346 = vunpack.c.l.b16 %v1289
        %v1347 = vunpack.c.l.b16 %v1290
        %v1348 = vunpack.c.l.b16 %v1291
        %v1349 = vunpack.c.l.b16 %v1292
        %v1350 = vunpack.c.l.b16 %v1293
        %v1351 = vunpack.c.l.b16 %v1294
        %v1352 = vunpack.c.l.b16 %v1295
        %v1353 = vunpack.c.l.b16 %v1296
        %v1354 = vunpack.c.l.b16 %v1297
        %v1355 = vunpack.c.l.b16 %v1298
        %v1356 = vunpack.c.l.b16 %v1299
        %v1357 = vunpack.c.l.b16 %v1300
        %v1358 = vpack.c.b16 %v1335, %v1334
        %v1359 = vpack.c.b16 %v1337, %v1336
        %v1360 = vpack.c.b16 %v1339, %v1338
        %v1361 = vpack.c.b16 %v1341, %v1340
        %v1362 = vpack.c.b16 %v1343, %v1342
        %v1363 = vpack.c.b16 %v1345, %v1344
        %v1364 = vpack.c.b16 %v1347, %v1346
        %v1365 = vpack.c.b16 %v1349, %v1348
        %v1366 = vpack.c.b16 %v1351, %v1350
        %v1367 = vpack.c.b16 %v1353, %v1352
        %v1368 = vpack.c.b16 %v1355, %v1354
        %v1369 = vpack.c.b16 %v1357, %v1356
        %v1383 = vsel %vm1163, %v1302, 0
        %1385 = vmatprep.subr.bf16.mxu0 0
        %1386 = vmatpush1.bf16.msra.mxu0 %v1358
        %1387 = vmatprep.subr.bf16.mxu0 0
        %1388 = vmatpush1.bf16.msra.mxu0 %v1359
        %1389 = vmatprep.subr.bf16.mxu0 0
        %1390 = vmatpush1.bf16.msra.mxu0 %v1360
        %1391 = vmatprep.subr.bf16.mxu0 0
        %1392 = vmatpush1.bf16.msra.mxu0 %v1361
        %1393 = vmatprep.subr.bf16.mxu0 0
        %1394 = vmatpush1.bf16.msra.mxu0 %v1362
        %1395 = vmatprep.subr.bf16.mxu0 0
        %1396 = vmatpush1.bf16.msra.mxu0 %v1363
        %1397 = vmatprep.subr.bf16.mxu0 0
        %1398 = vmatpush1.bf16.msra.mxu0 %v1364
        %1399 = vmatprep.subr.bf16.mxu0 0
        %1400 = vmatpush1.bf16.msra.mxu0 %v1365
        %1401 = vmatprep.subr.bf16.mxu0 0
        %1402 = vmatpush1.bf16.msra.mxu0 %v1366
        %1403 = vmatprep.subr.bf16.mxu0 0
        %1404 = vmatpush1.bf16.msra.mxu0 %v1367
        %1405 = vmatprep.subr.bf16.mxu0 0
        %1406 = vmatpush1.bf16.msra.mxu0 %v1368
        %1407 = vmatprep.subr.bf16.mxu0 0
        %1408 = vmatpush1.bf16.msra.mxu0 %v1369
        %1409 = vmatprep.subr.bf16.mxu0 0
        %1410 = vmatpush1.bf16.msra.mxu0 0
        %1411 = vmatprep.subr.bf16.mxu0 0
        %1412 = vmatpush1.bf16.msra.mxu0 0
        %1413 = vmatprep.subr.bf16.mxu0 0
        %1414 = vmatpush1.bf16.msra.mxu0 0
        %1415 = vmatprep.subr.bf16.mxu0 0
        %1416 = vmatpush1.bf16.msra.mxu0 0
        %1417 = vmatprep.mubr.bf16.mxu0 %v1383
        %1418 = vmatmul.mubr.bf16.gmra.mrb[0].mxu0 %v1301
        %v1419 = vpop.f32.mrb[0].mxu0
        %v1420 = vadd.f32 %v1308, %v1419
        %v1421 = vpop.f32.mrb[0].mxu0
        %v1422 = vpop.f32.mrb[0].mxu0
        %v1423 = vpop.f32.mrb[0].mxu0
        %1424 = vdwg.mxu0
        %v1425 = vadd.f32 %v1420, %v1145
        %v1426 = vld [vmem:[#allocation23] sm:$0x1]
        %v1427 = vld [vmem:[#allocation25] sm:$0x1]
        %v1428 = vsel %vm763, %v1425, 0.0
        %1429 = vadd.xlane.f32.xlu0 %v1428
        %v1430 = vpop.xlane.xlu0 %1429
        %v1431 = vmul.f32 %v1430, %v1115
        %v1432 = vsub.f32 %v1425, %v1431
        %v1433 = vmul.f32 %v1432, %v1432
        %v1434 = vsel %vm763, %v1433, 0.0
        %1435 = vadd.xlane.f32.xlu0 %v1434
        %v1436 = vpop.xlane.xlu0 %1435
        %v1437 = vmul.f32 %v1436, %v1115
        %v1438 = vadd.f32 %v1437, 1e-05
        %v1439 = vrsqrt.pop %v1438
        %v1440 = vmul.f32 %v1432, %v1439
        %v1442 = vlaneseq
        %v1443 = vshrl.u32 %v1442, 7
        %v1444 = vsub.s32 0, %v1443
        %v1445 = vrot.slane %v1426, %v1444
        %v1447 = vmul.f32 %v1440, %v1445
        %v1449 = vlaneseq
        %v1450 = vshrl.u32 %v1449, 7
        %v1451 = vsub.s32 0, %v1450
        %v1452 = vrot.slane %v1427, %v1451
        %v1454 = vadd.f32 %v1447, %v1452
        %v1455 = vmul.f32 %v1454, %v1143
        %1456 = vst.msk [vmem:[%s735] sm:$0xff] %vm763, %v1455
        %s1457 = sand.u32 %s379, 1
        %s1458 = scalar_lea.sflag [#allocation4], %s1457
        %s1459 = sand.u32 %s379, 1
        %s1460 = smul.addr %s1459, 8
        %s1461 = scalar_lea.vmem [#allocation26], %s1460
        // Predicated region
        $region141: #{tpu_custom_call.1} parent=79 // pred_check
          %p1462 = pneg %p389
        $region142: #{tpu_custom_call.1} parent=79 // pred_check_branch
          %1464 = sbr.rel (%p1462) target = $region144
        $region143: #{tpu_custom_call.1} parent=79 // pred_region
          %s1466 = ssub.s32 128, 128
          %1467 = vsyncadd %s1458, %s1466
          %s1468 = smul.addr %s41, 128
          %s1469 = scalar_lea.hbm %s15, %s1468
          %s1471 = sshll.u32 %s1461, 4
          %s1472 = int_to_ptr.vmem [resolvable:$true] %s1471
          %1474 = dma.vmem_to_hbm [thread:$0]  %s1472, 128, %s1469, %s1458
        $region144: #{tpu_custom_call.1} parent=79 // pred_fallthru
          _
      $region80: #{tpu_custom_call.1} parent=5 // pred_fallthru
        _
      %p1475 = scmp.le.s32.totalorder 2, %s36
      // Predicated region
      $region145: #{tpu_custom_call.1} parent=5 // pred_check
        %p1476 = pneg %p1475
      $region146: #{tpu_custom_call.1} parent=5 // pred_check_branch
        %1478 = sbr.rel (%p1476) target = $region148
      $region147: #{tpu_custom_call.1} parent=5 // pred_region
        %s1479 = ssub.s32 %s36, 2
        // Predicated region
        $region149: #{tpu_custom_call.1} parent=147 // pred_check
          %p1480 = pneg %p395
        $region150: #{tpu_custom_call.1} parent=147 // pred_check_branch
          %1482 = sbr.rel (%p1480) target = $region152
        $region151: #{tpu_custom_call.1} parent=147 // pred_region
          %s1483 = sand.u32 %s380, 1
          %s1484 = scalar_lea.sflag [#allocation4], %s1483
          %s1485 = sand.u32 %s380, 1
          %s1486 = smul.addr %s1485, 8
          %s1487 = scalar_lea.vmem [#allocation26], %s1486
          %1488 = dma.done %s1484, 128
        $region152: #{tpu_custom_call.1} parent=147 // pred_fallthru
          _
      $region148: #{tpu_custom_call.1} parent=5 // pred_fallthru
        _
    $region6: #{tpu_custom_call.1} parent=1 // loop_footer
      %s40 = sadd.s32 1, %s36
    $region7: #{tpu_custom_call.1} parent=1 // loop_footer_branch
      %35 = sbr.rel target = $region3
    $region8: #{tpu_custom_call.1} parent=1 // loop_exit
      _
    %1489 = vsyncpa [#allocation3], 1
    %s1490 = scalar_lea.sflag [#allocation3], 1
    %1491 = vsyncpa %s1490, 1
    %1492 = vsyncpa [#allocation6], 1
    %s1493 = scalar_lea.sflag [#allocation6], 1
    %1494 = vsyncpa %s1493, 1
    %1495 = vsyncpa [#allocation9], 1
    %1496 = vsyncpa [#allocation12], 1
    %1497 = vsyncpa [#allocation15], 1
    %1498 = vsyncpa [#allocation18], 1
    %1499 = vsyncpa [#allocation21], 1
    %1500 = vsyncpa [#allocation24], 1
    %1501 = vsyncpa [#allocation4], 1
    %s1502 = scalar_lea.sflag [#allocation4], 1
    %1503 = vsyncpa %s1502, 1

</llo_original>
